<compile_context>
chip_gen: v6e
topology: v6e:2x2x1
jax: 0.10.0
libtpu: 0.0.40
codegen_flags: <defaults>
</compile_context>

<pallas_src>
import functools

import jax
import jax.numpy as jnp
from jax import lax
from jax.experimental import pallas as pl
from jax.experimental.pallas import tpu as pltpu

INPUT_DIM = 27
PADDED_DIM = 32          # feature dim zero-padded to a multiple of 8 sublanes
HIDDEN = 128             # hidden_dim of the torch module


def _round_up(a, b):
    return (a + b - 1) // b * b


# --------------------------------------------------------------------------
# Kernel
# --------------------------------------------------------------------------
def _mlp_kernel(x_ref,
                w1_ref, b1_ref,
                w2_ref, b2_ref,
                w3_ref, b3_ref,
                wh1_ref, bh1_ref,
                wh2_ref, bh2_ref,
                out_ref):
    """Fused 5-matmul forward for one (bm, 32) batch tile.

    Hidden activations live as (features, bm) so batch sits on the lane axis.
    MXU operands use the weight dtype (bf16 on v6e/v7x); accumulation, bias
    add and ReLU stay in f32; hidden activations are carried in the operand
    dtype to halve load/store bytes between layers.
    """
    cdt = w1_ref.dtype            # MXU operand dtype (bf16 or f32)

    def layer(w_ref, b_ref, h, relu=True):
        y = jnp.dot(w_ref[...], h, preferred_element_type=jnp.float32) + b_ref[...]
        if relu:
            return jnp.maximum(y, 0.0).astype(cdt)
        return y

    # Layer 1: contract the zero-padded feature dim (32) of the (bm, 32) x
    # tile against w1 (128, 32) directly (rhs-transposed matmul) -> (128, bm).
    x = x_ref[...]                                                # (bm, 32)
    h = lax.dot_general(w1_ref[...], x,
                        (((1,), (1,)), ((), ())),
                        preferred_element_type=jnp.float32) + b1_ref[...]
    h = jnp.maximum(h, 0.0).astype(cdt)                           # (128, bm)

    h = layer(w2_ref, b2_ref, h)                                  # (256, bm)
    feats = layer(w3_ref, b3_ref, h)                              # (128, bm)
    hd = layer(wh1_ref, bh1_ref, feats)                           # (128, bm) fused heads
    out = layer(wh2_ref, bh2_ref, hd, relu=False)                 # (2, bm) f32
    out_ref[...] = out.astype(out_ref.dtype)


# --------------------------------------------------------------------------
# One-time parameter packing (hoisted off the per-call path)
# --------------------------------------------------------------------------
def pack_params(params, *, use_bf16=True):
    """Fuse heads, pad layer-1 K dim 27->32, cast dtypes, reshape biases.

    Call once and reuse the result across forward_packed() calls."""
    (w1, b1, w2, b2, w3, b3,
     wa1, ba1, wa2, ba2,
     ww1, bw1, ww2, bw2) = params

    # Fuse the two heads: one (128,128) hidden matmul + one (2,128)
    # block-diagonal output matmul.
    wh1 = jnp.concatenate([wa1, ww1], axis=0)                     # (128, 128)
    bh1 = jnp.concatenate([ba1, bw1], axis=0)                     # (128,)
    z = jnp.zeros_like(wa2)                                       # (1, 64)
    wh2 = jnp.concatenate([jnp.concatenate([wa2, z], axis=1),
                           jnp.concatenate([z, ww2], axis=1)],
                          axis=0)                                 # (2, 128)
    bh2 = jnp.concatenate([ba2, bw2], axis=0)                     # (2,)

    # Zero-pad layer-1 contraction dim 27 -> 32 (multiple of 8 sublanes).
    w1p = jnp.pad(w1, ((0, 0), (0, PADDED_DIM - INPUT_DIM)))      # (128, 32)

    wdt = jnp.bfloat16 if use_bf16 else jnp.float32
    weights = tuple(w.astype(wdt) for w in (w1p, w2, w3, wh1, wh2))
    biases = tuple(b.astype(jnp.float32).reshape(-1, 1)           # biases stay f32
                   for b in (b1, b2, b3, bh1, bh2))
    return weights, biases


def _pick_tile(B, bm):
    """Batch-tile width per grid step: as large as possible for throughput,
    but guarantee >= 2 grid steps when B >= 256 so the 'parallel' grid axis
    shards across v7x's two TensorCores."""
    n128 = -(-B // 128)                  # number of 128-wide batch chunks
    max_tiles = max(1, bm // 128)
    tiles = min(max_tiles, (n128 + 1) // 2) if n128 >= 2 else 1
    return tiles * 128


# --------------------------------------------------------------------------
# Forward pass (jitted wrapper around pallas_call)
# --------------------------------------------------------------------------
@functools.partial(jax.jit, static_argnames=("bm",))
def forward_packed(x, packed, *, bm=2048):
    """x: (B, 27) float32; packed = pack_params(...). Returns (area, wl), (B,)."""
    weights, biases = packed
    B, D = x.shape
    assert D == INPUT_DIM
    wdt = weights[0].dtype

    bm_eff = _pick_tile(B, bm)
    B_pad = _round_up(B, bm_eff)
    grid = (B_pad // bm_eff,)

    # Pad batch to a tile multiple and features 27 -> 32, cast to MXU dtype.
    # No host-side transpose; this fuses into one tiny op under jit.
    x_pad = jnp.pad(x, ((0, B_pad - B), (0, PADDED_DIM - D))).astype(wdt)

    in_specs = [pl.BlockSpec((bm_eff, PADDED_DIM), lambda i: (i, 0))]
    operands = [x_pad]
    # Constant weight/bias blocks: index_map always (0,0) so Pallas only DMAs
    # them once.  (pl.Buffered(1) would save ~0.35 MB of double-buffer VMEM,
    # but VMEM is nowhere near the limit on any generation, so keep defaults.)
    for w, b in zip(weights, biases):
        in_specs.append(pl.BlockSpec(w.shape, lambda i: (0, 0)))
        in_specs.append(pl.BlockSpec(b.shape, lambda i: (0, 0)))
        operands.extend([w, b])

    out = pl.pallas_call(
        _mlp_kernel,
        out_shape=jax.ShapeDtypeStruct((2, B_pad), jnp.float32),
        grid_spec=pltpu.PrefetchScalarGridSpec(
            num_scalar_prefetch=0,
            grid=grid,
            in_specs=in_specs,
            out_specs=pl.BlockSpec((2, bm_eff), lambda i: (0, i)),
        ),
        compiler_params=pltpu.CompilerParams(
            dimension_semantics=("parallel",)),   # shard grid steps across TCs (v7x)
    )(*operands)

    # torch: .squeeze() on (B, 1) -> (B,)  (note: for B == 1 torch returns a
    # 0-d scalar; we return shape (1,)).
    return out[0, :B], out[1, :B]


def graph_feature_predictor(x, params, *, bm=2048, use_bf16=True):
    """Convenience wrapper.  For repeated calls, hoist pack_params() yourself."""
    return forward_packed(x, pack_params(params, use_bf16=use_bf16), bm=bm)


# --------------------------------------------------------------------------
# Synthetic params + plain-JAX reference
# --------------------------------------------------------------------------
def init_params(key, input_dim=INPUT_DIM, hidden_dim=HIDDEN):
    """Deterministic synthetic params in torch nn.Linear layout: W (out,in), b (out,)."""
    shapes = [
        (hidden_dim, input_dim),         # feature_extractor.0
        (hidden_dim * 2, hidden_dim),    # feature_extractor.2
        (hidden_dim, hidden_dim * 2),    # feature_extractor.4
        (hidden_dim // 2, hidden_dim),   # area_head.0
        (1, hidden_dim // 2),            # area_head.2
        (hidden_dim // 2, hidden_dim),   # wirelength_head.0
        (1, hidden_dim // 2),            # wirelength_head.2
    ]
    params = []
    for shp in shapes:
        key, kw, kb = jax.random.split(key, 3)
        bound = 1.0 / jnp.sqrt(shp[1])
        w = jax.random.uniform(kw, shp, jnp.float32, -bound, bound)
        b = jax.random.uniform(kb, (shp[0],), jnp.float32, -bound, bound)
        params.extend([w, b])
    return tuple(params)


def _reference(x, params):
    """Plain-JAX (f32) reference of the torch forward."""
    (w1, b1, w2, b2, w3, b3, wa1, ba1, wa2, ba2, ww1, bw1, ww2, bw2) = params
    h = jnp.maximum(x @ w1.T + b1, 0.0)
    h = jnp.maximum(h @ w2.T + b2, 0.0)
    f = jnp.maximum(h @ w3.T + b3, 0.0)
    a = jnp.maximum(f @ wa1.T + ba1, 0.0) @ wa2.T + ba2
    w = jnp.maximum(f @ ww1.T + bw1, 0.0) @ ww2.T + bw2
    return jnp.squeeze(a, -1), jnp.squeeze(w, -1)


if __name__ == "__main__":
    key = jax.random.PRNGKey(0)
    k_params, k_x = jax.random.split(key)

    params = init_params(k_params)
    B = 16
    x = jax.random.normal(k_x, (B, INPUT_DIM), jnp.float32)

    ref_a, ref_w = _reference(x, params)

    # Recommended configuration: bf16 MXU operands, f32 accumulate.
    packed = pack_params(params, use_bf16=True)          # hoisted, done once
    area, wirelength = forward_packed(x, packed)
    area = jax.block_until_ready(area)
    wirelength = jax.block_until_ready(wirelength)
    assert area.shape == (B,) and wirelength.shape == (B,)
    assert jnp.allclose(area, ref_a, atol=5e-2, rtol=5e-2), \
        float(jnp.max(jnp.abs(area - ref_a)))
    assert jnp.allclose(wirelength, ref_w, atol=5e-2, rtol=5e-2), \
        float(jnp.max(jnp.abs(wirelength - ref_w)))

    # Exact f32 path (same kernel, f32 operands) against tight tolerance.
    area32, wl32 = graph_feature_predictor(x, params, use_bf16=False)
    area32 = jax.block_until_ready(area32)
    wl32 = jax.block_until_ready(wl32)
    assert jnp.allclose(area32, ref_a, atol=1e-4, rtol=1e-4), \
        float(jnp.max(jnp.abs(area32 - ref_a)))
    assert jnp.allclose(wl32, ref_w, atol=1e-4, rtol=1e-4), \
        float(jnp.max(jnp.abs(wl32 - ref_w)))

    print("KERNEL_OK")
</pallas_src>

<mosaic_0001>
module attributes {stable_mosaic.version = 11 : i64} {
  func.func @_mlp_kernel(%arg0: i32, %arg1: memref<128x32xbf16, #tpu.memory_space<vmem>>, %arg2: memref<128x32xbf16, #tpu.memory_space<vmem>>, %arg3: memref<128x1xf32, #tpu.memory_space<vmem>>, %arg4: memref<256x128xbf16, #tpu.memory_space<vmem>>, %arg5: memref<256x1xf32, #tpu.memory_space<vmem>>, %arg6: memref<128x256xbf16, #tpu.memory_space<vmem>>, %arg7: memref<128x1xf32, #tpu.memory_space<vmem>>, %arg8: memref<128x128xbf16, #tpu.memory_space<vmem>>, %arg9: memref<128x1xf32, #tpu.memory_space<vmem>>, %arg10: memref<2x128xbf16, #tpu.memory_space<vmem>>, %arg11: memref<2x1xf32, #tpu.memory_space<vmem>>, %arg12: memref<2x128xf32, #tpu.memory_space<vmem>>) attributes {dimension_semantics = [#tpu.dimension_semantics<parallel>], iteration_bounds = array<i64: 1>, scalar_prefetch = 0 : i64, scratch_operands = 0 : i64, tpu.core_type = #tpu.core_type<tc>, window_params = [{transform_indices = @transform_0, window_bounds = array<i64: 128, 32>}, {pipeline_mode = #tpu.pipeline_mode<synchronous>, transform_indices = @transform_1, window_bounds = array<i64: 128, 32>}, {pipeline_mode = #tpu.pipeline_mode<synchronous>, transform_indices = @transform_2, window_bounds = array<i64: 128, 1>}, {pipeline_mode = #tpu.pipeline_mode<synchronous>, transform_indices = @transform_3, window_bounds = array<i64: 256, 128>}, {pipeline_mode = #tpu.pipeline_mode<synchronous>, transform_indices = @transform_4, window_bounds = array<i64: 256, 1>}, {pipeline_mode = #tpu.pipeline_mode<synchronous>, transform_indices = @transform_5, window_bounds = array<i64: 128, 256>}, {pipeline_mode = #tpu.pipeline_mode<synchronous>, transform_indices = @transform_6, window_bounds = array<i64: 128, 1>}, {pipeline_mode = #tpu.pipeline_mode<synchronous>, transform_indices = @transform_7, window_bounds = array<i64: 128, 128>}, {pipeline_mode = #tpu.pipeline_mode<synchronous>, transform_indices = @transform_8, window_bounds = array<i64: 128, 1>}, {pipeline_mode = #tpu.pipeline_mode<synchronous>, transform_indices = @transform_9, window_bounds = array<i64: 2, 128>}, {pipeline_mode = #tpu.pipeline_mode<synchronous>, transform_indices = @transform_10, window_bounds = array<i64: 2, 1>}, {transform_indices = @transform_11, window_bounds = array<i64: 2, 128>}]} {
    %c0 = arith.constant 0 : index
    %c0_0 = arith.constant 0 : index
    %0 = vector.load %arg1[%c0, %c0_0] : memref<128x32xbf16, #tpu.memory_space<vmem>>, vector<128x32xbf16>
    %c0_1 = arith.constant 0 : index
    %c0_2 = arith.constant 0 : index
    %1 = vector.load %arg2[%c0_1, %c0_2] : memref<128x32xbf16, #tpu.memory_space<vmem>>, vector<128x32xbf16>
    %cst = arith.constant dense<0.000000e+00> : vector<128x128xf32>
    %2 = tpu.matmul %1, %0, %cst {dimension_numbers = #tpu.dot_dimension_numbers<[1], [1], [0], [0], [0, 0, 1, 0], [], []>} : vector<128x32xbf16>, vector<128x32xbf16>, vector<128x128xf32> -> vector<128x128xf32>
    %c0_3 = arith.constant 0 : index
    %c0_4 = arith.constant 0 : index
    %3 = vector.load %arg3[%c0_3, %c0_4] : memref<128x1xf32, #tpu.memory_space<vmem>>, vector<128x1xf32>
    %4 = vector.broadcast %3 : vector<128x1xf32> to vector<128x128xf32>
    %5 = arith.addf %2, %4 : vector<128x128xf32>
    %cst_5 = arith.constant 0.000000e+00 : f32
    %6 = vector.broadcast %cst_5 : f32 to vector<128x128xf32>
    %7 = arith.maximumf %5, %6 : vector<128x128xf32>
    %8 = arith.truncf %7 : vector<128x128xf32> to vector<128x128xbf16>
    %c0_6 = arith.constant 0 : index
    %c0_7 = arith.constant 0 : index
    %9 = vector.load %arg4[%c0_6, %c0_7] : memref<256x128xbf16, #tpu.memory_space<vmem>>, vector<256x128xbf16>
    %cst_8 = arith.constant dense<0.000000e+00> : vector<256x128xf32>
    %10 = tpu.matmul %9, %8, %cst_8 {dimension_numbers = #tpu.dot_dimension_numbers<[1], [0], [0], [1], [0, 0, 1, 1], [], []>} : vector<256x128xbf16>, vector<128x128xbf16>, vector<256x128xf32> -> vector<256x128xf32>
    %c0_9 = arith.constant 0 : index
    %c0_10 = arith.constant 0 : index
    %11 = vector.load %arg5[%c0_9, %c0_10] : memref<256x1xf32, #tpu.memory_space<vmem>>, vector<256x1xf32>
    %12 = vector.broadcast %11 : vector<256x1xf32> to vector<256x128xf32>
    %13 = arith.addf %10, %12 : vector<256x128xf32>
    %cst_11 = arith.constant 0.000000e+00 : f32
    %14 = vector.broadcast %cst_11 : f32 to vector<256x128xf32>
    %15 = arith.maximumf %13, %14 : vector<256x128xf32>
    %16 = arith.truncf %15 : vector<256x128xf32> to vector<256x128xbf16>
    %c0_12 = arith.constant 0 : index
    %c0_13 = arith.constant 0 : index
    %17 = vector.load %arg6[%c0_12, %c0_13] : memref<128x256xbf16, #tpu.memory_space<vmem>>, vector<128x256xbf16>
    %cst_14 = arith.constant dense<0.000000e+00> : vector<128x128xf32>
    %18 = tpu.matmul %17, %16, %cst_14 {dimension_numbers = #tpu.dot_dimension_numbers<[1], [0], [0], [1], [0, 0, 1, 1], [], []>} : vector<128x256xbf16>, vector<256x128xbf16>, vector<128x128xf32> -> vector<128x128xf32>
    %c0_15 = arith.constant 0 : index
    %c0_16 = arith.constant 0 : index
    %19 = vector.load %arg7[%c0_15, %c0_16] : memref<128x1xf32, #tpu.memory_space<vmem>>, vector<128x1xf32>
    %20 = vector.broadcast %19 : vector<128x1xf32> to vector<128x128xf32>
    %21 = arith.addf %18, %20 : vector<128x128xf32>
    %cst_17 = arith.constant 0.000000e+00 : f32
    %22 = vector.broadcast %cst_17 : f32 to vector<128x128xf32>
    %23 = arith.maximumf %21, %22 : vector<128x128xf32>
    %24 = arith.truncf %23 : vector<128x128xf32> to vector<128x128xbf16>
    %c0_18 = arith.constant 0 : index
    %c0_19 = arith.constant 0 : index
    %25 = vector.load %arg8[%c0_18, %c0_19] : memref<128x128xbf16, #tpu.memory_space<vmem>>, vector<128x128xbf16>
    %cst_20 = arith.constant dense<0.000000e+00> : vector<128x128xf32>
    %26 = tpu.matmul %25, %24, %cst_20 {dimension_numbers = #tpu.dot_dimension_numbers<[1], [0], [0], [1], [0, 0, 1, 1], [], []>} : vector<128x128xbf16>, vector<128x128xbf16>, vector<128x128xf32> -> vector<128x128xf32>
    %c0_21 = arith.constant 0 : index
    %c0_22 = arith.constant 0 : index
    %27 = vector.load %arg9[%c0_21, %c0_22] : memref<128x1xf32, #tpu.memory_space<vmem>>, vector<128x1xf32>
    %28 = vector.broadcast %27 : vector<128x1xf32> to vector<128x128xf32>
    %29 = arith.addf %26, %28 : vector<128x128xf32>
    %cst_23 = arith.constant 0.000000e+00 : f32
    %30 = vector.broadcast %cst_23 : f32 to vector<128x128xf32>
    %31 = arith.maximumf %29, %30 : vector<128x128xf32>
    %32 = arith.truncf %31 : vector<128x128xf32> to vector<128x128xbf16>
    %c0_24 = arith.constant 0 : index
    %c0_25 = arith.constant 0 : index
    %33 = vector.load %arg10[%c0_24, %c0_25] : memref<2x128xbf16, #tpu.memory_space<vmem>>, vector<2x128xbf16>
    %cst_26 = arith.constant dense<0.000000e+00> : vector<2x128xf32>
    %34 = tpu.matmul %33, %32, %cst_26 {dimension_numbers = #tpu.dot_dimension_numbers<[1], [0], [0], [1], [0, 0, 1, 1], [], []>} : vector<2x128xbf16>, vector<128x128xbf16>, vector<2x128xf32> -> vector<2x128xf32>
    %c0_27 = arith.constant 0 : index
    %c0_28 = arith.constant 0 : index
    %35 = vector.load %arg11[%c0_27, %c0_28] : memref<2x1xf32, #tpu.memory_space<vmem>>, vector<2x1xf32>
    %36 = vector.broadcast %35 : vector<2x1xf32> to vector<2x128xf32>
    %37 = arith.addf %34, %36 : vector<2x128xf32>
    %c0_29 = arith.constant 0 : index
    %c0_30 = arith.constant 0 : index
    %38 = vector.load %arg12[%c0_29, %c0_30] : memref<2x128xf32, #tpu.memory_space<vmem>>, vector<2x128xf32>
    tpu.vector_store %arg12[%c0_29, %c0_30], %37 {strides = array<i32>} : memref<2x128xf32, #tpu.memory_space<vmem>>, vector<2x128xf32>,
    return
  }
  func.func @transform_0(%arg0: i32) -> (i32, i32) {
    %c0_i32 = arith.constant 0 : i32
    %c0_i32_0 = arith.constant 0 : i32
    return %arg0, %c0_i32 : i32, i32
  }
  func.func @transform_1(%arg0: i32) -> (i32, i32) {
    %c0_i32 = arith.constant 0 : i32
    %c0_i32_0 = arith.constant 0 : i32
    %c0_i32_1 = arith.constant 0 : i32
    return %c0_i32, %c0_i32_0 : i32, i32
  }
  func.func @transform_2(%arg0: i32) -> (i32, i32) {
    %c0_i32 = arith.constant 0 : i32
    %c0_i32_0 = arith.constant 0 : i32
    %c0_i32_1 = arith.constant 0 : i32
    return %c0_i32, %c0_i32_0 : i32, i32
  }
  func.func @transform_3(%arg0: i32) -> (i32, i32) {
    %c0_i32 = arith.constant 0 : i32
    %c0_i32_0 = arith.constant 0 : i32
    %c0_i32_1 = arith.constant 0 : i32
    return %c0_i32, %c0_i32_0 : i32, i32
  }
  func.func @transform_4(%arg0: i32) -> (i32, i32) {
    %c0_i32 = arith.constant 0 : i32
    %c0_i32_0 = arith.constant 0 : i32
    %c0_i32_1 = arith.constant 0 : i32
    return %c0_i32, %c0_i32_0 : i32, i32
  }
  func.func @transform_5(%arg0: i32) -> (i32, i32) {
    %c0_i32 = arith.constant 0 : i32
    %c0_i32_0 = arith.constant 0 : i32
    %c0_i32_1 = arith.constant 0 : i32
    return %c0_i32, %c0_i32_0 : i32, i32
  }
  func.func @transform_6(%arg0: i32) -> (i32, i32) {
    %c0_i32 = arith.constant 0 : i32
    %c0_i32_0 = arith.constant 0 : i32
    %c0_i32_1 = arith.constant 0 : i32
    return %c0_i32, %c0_i32_0 : i32, i32
  }
  func.func @transform_7(%arg0: i32) -> (i32, i32) {
    %c0_i32 = arith.constant 0 : i32
    %c0_i32_0 = arith.constant 0 : i32
    %c0_i32_1 = arith.constant 0 : i32
    return %c0_i32, %c0_i32_0 : i32, i32
  }
  func.func @transform_8(%arg0: i32) -> (i32, i32) {
    %c0_i32 = arith.constant 0 : i32
    %c0_i32_0 = arith.constant 0 : i32
    %c0_i32_1 = arith.constant 0 : i32
    return %c0_i32, %c0_i32_0 : i32, i32
  }
  func.func @transform_9(%arg0: i32) -> (i32, i32) {
    %c0_i32 = arith.constant 0 : i32
    %c0_i32_0 = arith.constant 0 : i32
    %c0_i32_1 = arith.constant 0 : i32
    return %c0_i32, %c0_i32_0 : i32, i32
  }
  func.func @transform_10(%arg0: i32) -> (i32, i32) {
    %c0_i32 = arith.constant 0 : i32
    %c0_i32_0 = arith.constant 0 : i32
    %c0_i32_1 = arith.constant 0 : i32
    return %c0_i32, %c0_i32_0 : i32, i32
  }
  func.func @transform_11(%arg0: i32) -> (i32, i32) {
    %c0_i32 = arith.constant 0 : i32
    %c0_i32_0 = arith.constant 0 : i32
    return %c0_i32, %arg0 : i32, i32
  }
}

</mosaic_0001>

<llo_original>
// kernel: forward_packed.1
$region0: #{forward_packed.1}
  #allocation0 [shape = 'u32[]', space=smem, size = 0x4, offset = 0x4, fixed_abs, tag = 'smem constant byte address 0x4 - core index']
  #allocation1 [shape = 'u32[144,128]{1,0:T(1,128)}', space=vmem, size = 0x12000, scoped, tag = 'internal scratch']
  %s0 = inlined_call_operand.vmem [shape: bf16[128,32], index: 0, kind: input, shape index: {}]
  %s1 = inlined_call_operand.vmem [shape: bf16[128,32], index: 1, kind: input, shape index: {}]
  %s2 = inlined_call_operand.vmem [shape: f32[128,1], index: 2, kind: input, shape index: {}]
  %s3 = inlined_call_operand.vmem [shape: bf16[256,128], index: 3, kind: input, shape index: {}]
  %s4 = inlined_call_operand.vmem [shape: f32[256,1], index: 4, kind: input, shape index: {}]
  %s5 = inlined_call_operand.vmem [shape: bf16[128,256], index: 5, kind: input, shape index: {}]
  %s6 = inlined_call_operand.vmem [shape: f32[128,1], index: 6, kind: input, shape index: {}]
  %s7 = inlined_call_operand.vmem [shape: bf16[128,128], index: 7, kind: input, shape index: {}]
  %s8 = inlined_call_operand.vmem [shape: f32[128,1], index: 8, kind: input, shape index: {}]
  %s9 = inlined_call_operand.vmem [shape: bf16[2,128], index: 9, kind: input, shape index: {}]
  %s10 = inlined_call_operand.vmem [shape: f32[2,1], index: 10, kind: input, shape index: {}]
  %s11 = inlined_call_operand.vmem [shape: f32[2,128], index: 11, kind: output, shape index: {}]
  %s12 = sld [smem:[#allocation0]]
  $region54: #{forward_packed.1} parent=0
    _
  %s14 = ssub.s32 1, %s12
  %s15 = scalar_select 0, %s14, %s12
  // Predicated region
  $region2: #{forward_packed.1} parent=0 // pred_check
    _
  $region3: #{forward_packed.1} parent=0 // pred_check_branch
    %17 = sbr.rel (0) target = $region5
  $region4: #{forward_packed.1} parent=0 // pred_region
    _
  $region5: #{forward_packed.1} parent=0 // pred_fallthru
    _
  // Predicated region
  $region6: #{forward_packed.1} parent=0 // pred_check
    _
  $region7: #{forward_packed.1} parent=0 // pred_check_branch
    %19 = sbr.rel (0) target = $region9
  $region8: #{forward_packed.1} parent=0 // pred_region
    _
  $region9: #{forward_packed.1} parent=0 // pred_fallthru
    _
  // Predicated region
  $region10: #{forward_packed.1} parent=0 // pred_check
    _
  $region11: #{forward_packed.1} parent=0 // pred_check_branch
    %21 = sbr.rel (0) target = $region13
  $region12: #{forward_packed.1} parent=0 // pred_region
    _
  $region13: #{forward_packed.1} parent=0 // pred_fallthru
    _
  // Predicated region
  $region14: #{forward_packed.1} parent=0 // pred_check
    _
  $region15: #{forward_packed.1} parent=0 // pred_check_branch
    %23 = sbr.rel (0) target = $region17
  $region16: #{forward_packed.1} parent=0 // pred_region
    _
  $region17: #{forward_packed.1} parent=0 // pred_fallthru
    _
  // Predicated region
  $region18: #{forward_packed.1} parent=0 // pred_check
    _
  $region19: #{forward_packed.1} parent=0 // pred_check_branch
    %25 = sbr.rel (0) target = $region21
  $region20: #{forward_packed.1} parent=0 // pred_region
    _
  $region21: #{forward_packed.1} parent=0 // pred_fallthru
    _
  // Predicated region
  $region22: #{forward_packed.1} parent=0 // pred_check
    _
  $region23: #{forward_packed.1} parent=0 // pred_check_branch
    %27 = sbr.rel (0) target = $region25
  $region24: #{forward_packed.1} parent=0 // pred_region
    _
  $region25: #{forward_packed.1} parent=0 // pred_fallthru
    _
  // Predicated region
  $region26: #{forward_packed.1} parent=0 // pred_check
    _
  $region27: #{forward_packed.1} parent=0 // pred_check_branch
    %29 = sbr.rel (0) target = $region29
  $region28: #{forward_packed.1} parent=0 // pred_region
    _
  $region29: #{forward_packed.1} parent=0 // pred_fallthru
    _
  // Predicated region
  $region30: #{forward_packed.1} parent=0 // pred_check
    _
  $region31: #{forward_packed.1} parent=0 // pred_check_branch
    %31 = sbr.rel (0) target = $region33
  $region32: #{forward_packed.1} parent=0 // pred_region
    _
  $region33: #{forward_packed.1} parent=0 // pred_fallthru
    _
  // Predicated region
  $region34: #{forward_packed.1} parent=0 // pred_check
    _
  $region35: #{forward_packed.1} parent=0 // pred_check_branch
    %33 = sbr.rel (0) target = $region37
  $region36: #{forward_packed.1} parent=0 // pred_region
    _
  $region37: #{forward_packed.1} parent=0 // pred_fallthru
    _
  // Predicated region
  $region38: #{forward_packed.1} parent=0 // pred_check
    _
  $region39: #{forward_packed.1} parent=0 // pred_check_branch
    %35 = sbr.rel (0) target = $region41
  $region40: #{forward_packed.1} parent=0 // pred_region
    _
  $region41: #{forward_packed.1} parent=0 // pred_fallthru
    _
  // Predicated region
  $region42: #{forward_packed.1} parent=0 // pred_check
    _
  $region43: #{forward_packed.1} parent=0 // pred_check_branch
    %37 = sbr.rel (0) target = $region45
  $region44: #{forward_packed.1} parent=0 // pred_region
    _
  $region45: #{forward_packed.1} parent=0 // pred_fallthru
    _
  %v39 = vld [vmem:[%s0] sm:$0xf]
  %v40 = vld [vmem:[%s0 + $0x4] sm:$0xf]
  %v41 = vld [vmem:[%s0 + $0x8] sm:$0xf]
  %v42 = vld [vmem:[%s0 + $0xc] sm:$0xf]
  %v43 = vld [vmem:[%s0 + $0x10] sm:$0xf]
  %v44 = vld [vmem:[%s0 + $0x14] sm:$0xf]
  %v45 = vld [vmem:[%s0 + $0x18] sm:$0xf]
  %v46 = vld [vmem:[%s0 + $0x1c] sm:$0xf]
  %v47 = vld [vmem:[%s0 + $0x20] sm:$0xf]
  %v48 = vld [vmem:[%s0 + $0x24] sm:$0xf]
  %v49 = vld [vmem:[%s0 + $0x28] sm:$0xf]
  %v50 = vld [vmem:[%s0 + $0x2c] sm:$0xf]
  %v51 = vld [vmem:[%s0 + $0x30] sm:$0xf]
  %v52 = vld [vmem:[%s0 + $0x34] sm:$0xf]
  %v53 = vld [vmem:[%s0 + $0x38] sm:$0xf]
  %v54 = vld [vmem:[%s0 + $0x3c] sm:$0xf]
  %v55 = vld [vmem:[%s1] sm:$0xf]
  %v56 = vld [vmem:[%s1 + $0x4] sm:$0xf]
  %v57 = vld [vmem:[%s1 + $0x8] sm:$0xf]
  %v58 = vld [vmem:[%s1 + $0xc] sm:$0xf]
  %v59 = vld [vmem:[%s1 + $0x10] sm:$0xf]
  %v60 = vld [vmem:[%s1 + $0x14] sm:$0xf]
  %v61 = vld [vmem:[%s1 + $0x18] sm:$0xf]
  %v62 = vld [vmem:[%s1 + $0x1c] sm:$0xf]
  %v63 = vld [vmem:[%s1 + $0x20] sm:$0xf]
  %v64 = vld [vmem:[%s1 + $0x24] sm:$0xf]
  %v65 = vld [vmem:[%s1 + $0x28] sm:$0xf]
  %v66 = vld [vmem:[%s1 + $0x2c] sm:$0xf]
  %v67 = vld [vmem:[%s1 + $0x30] sm:$0xf]
  %v68 = vld [vmem:[%s1 + $0x34] sm:$0xf]
  %v69 = vld [vmem:[%s1 + $0x38] sm:$0xf]
  %v70 = vld [vmem:[%s1 + $0x3c] sm:$0xf]
  %v71 = vld [vmem:[%s2] sm:$0xff]
  %v72 = vld [vmem:[%s2 + $0x8] sm:$0xff]
  %v73 = vld [vmem:[%s2 + $0x10] sm:$0xff]
  %v74 = vld [vmem:[%s2 + $0x18] sm:$0xff]
  %v75 = vld [vmem:[%s2 + $0x20] sm:$0xff]
  %v76 = vld [vmem:[%s2 + $0x28] sm:$0xff]
  %v77 = vld [vmem:[%s2 + $0x30] sm:$0xff]
  %v78 = vld [vmem:[%s2 + $0x38] sm:$0xff]
  %v79 = vld [vmem:[%s2 + $0x40] sm:$0xff]
  %v80 = vld [vmem:[%s2 + $0x48] sm:$0xff]
  %v81 = vld [vmem:[%s2 + $0x50] sm:$0xff]
  %v82 = vld [vmem:[%s2 + $0x58] sm:$0xff]
  %v83 = vld [vmem:[%s2 + $0x60] sm:$0xff]
  %v84 = vld [vmem:[%s2 + $0x68] sm:$0xff]
  %v85 = vld [vmem:[%s2 + $0x70] sm:$0xff]
  %v86 = vld [vmem:[%s2 + $0x78] sm:$0xff]
  %88 = vset.pattern.permute.xlu0 0
  %89 = vperm.xlu0 %88, %v71
  %v90 = vpop.permute.xlu0 %89
  %93 = vset.pattern.permute.xlu0 0
  %94 = vperm.xlu0 %93, %v72
  %v95 = vpop.permute.xlu0 %94
  %98 = vset.pattern.permute.xlu0 0
  %99 = vperm.xlu0 %98, %v73
  %v100 = vpop.permute.xlu0 %99
  %103 = vset.pattern.permute.xlu0 0
  %104 = vperm.xlu0 %103, %v74
  %v105 = vpop.permute.xlu0 %104
  %108 = vset.pattern.permute.xlu0 0
  %109 = vperm.xlu0 %108, %v75
  %v110 = vpop.permute.xlu0 %109
  %113 = vset.pattern.permute.xlu0 0
  %114 = vperm.xlu0 %113, %v76
  %v115 = vpop.permute.xlu0 %114
  %118 = vset.pattern.permute.xlu0 0
  %119 = vperm.xlu0 %118, %v77
  %v120 = vpop.permute.xlu0 %119
  %123 = vset.pattern.permute.xlu0 0
  %124 = vperm.xlu0 %123, %v78
  %v125 = vpop.permute.xlu0 %124
  %128 = vset.pattern.permute.xlu0 0
  %129 = vperm.xlu0 %128, %v79
  %v130 = vpop.permute.xlu0 %129
  %133 = vset.pattern.permute.xlu0 0
  %134 = vperm.xlu0 %133, %v80
  %v135 = vpop.permute.xlu0 %134
  %138 = vset.pattern.permute.xlu0 0
  %139 = vperm.xlu0 %138, %v81
  %v140 = vpop.permute.xlu0 %139
  %143 = vset.pattern.permute.xlu0 0
  %144 = vperm.xlu0 %143, %v82
  %v145 = vpop.permute.xlu0 %144
  %148 = vset.pattern.permute.xlu0 0
  %149 = vperm.xlu0 %148, %v83
  %v150 = vpop.permute.xlu0 %149
  %153 = vset.pattern.permute.xlu0 0
  %154 = vperm.xlu0 %153, %v84
  %v155 = vpop.permute.xlu0 %154
  %158 = vset.pattern.permute.xlu0 0
  %159 = vperm.xlu0 %158, %v85
  %v160 = vpop.permute.xlu0 %159
  %163 = vset.pattern.permute.xlu0 0
  %164 = vperm.xlu0 %163, %v86
  %v165 = vpop.permute.xlu0 %164
  %v183 = vunpack.c.l.b16 %v55
  %v184 = vunpack.c.l.b16 %v56
  %v185 = vunpack.c.l.b16 %v57
  %v186 = vunpack.c.l.b16 %v58
  %v187 = vunpack.c.l.b16 %v59
  %v188 = vunpack.c.l.b16 %v60
  %v189 = vunpack.c.l.b16 %v61
  %v190 = vunpack.c.l.b16 %v62
  %v191 = vunpack.c.l.b16 %v63
  %v192 = vunpack.c.l.b16 %v64
  %v193 = vunpack.c.l.b16 %v65
  %v194 = vunpack.c.l.b16 %v66
  %v195 = vunpack.c.l.b16 %v67
  %v196 = vunpack.c.l.b16 %v68
  %v197 = vunpack.c.l.b16 %v69
  %v198 = vunpack.c.l.b16 %v70
  %v199 = vpack.c.b16 %v184, %v183
  %v200 = vpack.c.b16 %v186, %v185
  %v201 = vpack.c.b16 %v188, %v187
  %v202 = vpack.c.b16 %v190, %v189
  %v203 = vpack.c.b16 %v192, %v191
  %v204 = vpack.c.b16 %v194, %v193
  %v205 = vpack.c.b16 %v196, %v195
  %v206 = vpack.c.b16 %v198, %v197
  %v223 = vunpack.c.l.b16 %v39
  %v224 = vunpack.c.l.b16 %v40
  %v225 = vunpack.c.l.b16 %v41
  %v226 = vunpack.c.l.b16 %v42
  %v227 = vunpack.c.l.b16 %v43
  %v228 = vunpack.c.l.b16 %v44
  %v229 = vunpack.c.l.b16 %v45
  %v230 = vunpack.c.l.b16 %v46
  %v231 = vunpack.c.l.b16 %v47
  %v232 = vunpack.c.l.b16 %v48
  %v233 = vunpack.c.l.b16 %v49
  %v234 = vunpack.c.l.b16 %v50
  %v235 = vunpack.c.l.b16 %v51
  %v236 = vunpack.c.l.b16 %v52
  %v237 = vunpack.c.l.b16 %v53
  %v238 = vunpack.c.l.b16 %v54
  %v239 = vpack.c.b16 %v224, %v223
  %v240 = vpack.c.b16 %v226, %v225
  %v241 = vpack.c.b16 %v228, %v227
  %v242 = vpack.c.b16 %v230, %v229
  %v243 = vpack.c.b16 %v232, %v231
  %v244 = vpack.c.b16 %v234, %v233
  %v245 = vpack.c.b16 %v236, %v235
  %v246 = vpack.c.b16 %v238, %v237
  %vm247 = vcmask 261120
  %v249 = vsel %vm247, %v199, 0
  %v252 = vsel %vm247, %v200, 0
  %v255 = vsel %vm247, %v201, 0
  %v258 = vsel %vm247, %v202, 0
  %v261 = vsel %vm247, %v203, 0
  %v264 = vsel %vm247, %v204, 0
  %v267 = vsel %vm247, %v205, 0
  %v270 = vsel %vm247, %v206, 0
  %v273 = vsel %vm247, %v239, 0
  %v276 = vsel %vm247, %v240, 0
  %v279 = vsel %vm247, %v241, 0
  %v282 = vsel %vm247, %v242, 0
  %v285 = vsel %vm247, %v243, 0
  %v288 = vsel %vm247, %v244, 0
  %v291 = vsel %vm247, %v245, 0
  %v294 = vsel %vm247, %v246, 0
  %296 = vmatprep.subr.bf16.mxu0 0
  %297 = vmatpush1.bf16.xpose.msra.mxu0 %v294
  %298 = vmatprep.subr.bf16.mxu0 0
  %299 = vmatpush1.bf16.xpose.msra.mxu0 %v291
  %300 = vmatprep.subr.bf16.mxu0 0
  %301 = vmatpush1.bf16.xpose.msra.mxu0 %v288
  %302 = vmatprep.subr.bf16.mxu0 0
  %303 = vmatpush1.bf16.xpose.msra.mxu0 %v285
  %304 = vmatprep.subr.bf16.mxu0 0
  %305 = vmatpush1.bf16.xpose.msra.mxu0 %v282
  %306 = vmatprep.subr.bf16.mxu0 0
  %307 = vmatpush1.bf16.xpose.msra.mxu0 %v279
  %308 = vmatprep.subr.bf16.mxu0 0
  %309 = vmatpush1.bf16.xpose.msra.mxu0 %v276
  %310 = vmatprep.subr.bf16.mxu0 0
  %311 = vmatpush1.bf16.xpose.msra.mxu0 %v273
  %312 = vmatprep.subr.bf16.mxu0 0
  %313 = vmatpush2.bf16.xpose.msra.mxu0 0
  %314 = vmatprep.subr.bf16.mxu0 0
  %315 = vmatpush2.bf16.xpose.msra.mxu0 0
  %316 = vmatprep.subr.bf16.mxu0 0
  %317 = vmatpush2.bf16.xpose.msra.mxu0 0
  %318 = vmatprep.subr.bf16.mxu0 0
  %319 = vmatpush2.bf16.xpose.msra.mxu0 0
  %320 = vmatprep.subr.bf16.mxu0 0
  %321 = vmatpush2.bf16.xpose.msra.mxu0 0
  %322 = vmatprep.subr.bf16.mxu0 0
  %323 = vmatpush2.bf16.xpose.msra.mxu0 0
  %324 = vmatprep.subr.bf16.mxu0 0
  %325 = vmatpush2.bf16.xpose.msra.mxu0 0
  %326 = vmatprep.subr.bf16.mxu0 0
  %327 = vmatpush2.bf16.xpose.msra.mxu0 0
  %328 = vmatprep.mubr.bf16.mxu0 0
  %329 = vmatmul.mubr.bf16.gmra.mxu0 %v249
  %v330 = vpop.f32.mrf.mxu0
  %v331 = vadd.f32 %v90, %v330
  %v332 = vpop.f32.mrf.mxu0
  %v333 = vpop.f32.mrf.mxu0
  %v334 = vadd.f32 %v95, %v333
  %v335 = vpop.f32.mrf.mxu0
  %336 = vmatprep.mubr.bf16.mxu0 0
  %337 = vmatmul.mubr.bf16.gmra.mxu0 %v252
  %v338 = vpop.f32.mrf.mxu0
  %v339 = vadd.f32 %v100, %v338
  %v340 = vpop.f32.mrf.mxu0
  %v341 = vpop.f32.mrf.mxu0
  %v342 = vadd.f32 %v105, %v341
  %v343 = vpop.f32.mrf.mxu0
  %344 = vmatprep.mubr.bf16.mxu0 0
  %345 = vmatmul.mubr.bf16.gmra.mxu0 %v255
  %v346 = vpop.f32.mrf.mxu0
  %v347 = vadd.f32 %v110, %v346
  %v348 = vpop.f32.mrf.mxu0
  %v349 = vpop.f32.mrf.mxu0
  %v350 = vadd.f32 %v115, %v349
  %v351 = vpop.f32.mrf.mxu0
  %352 = vmatprep.mubr.bf16.mxu0 0
  %353 = vmatmul.mubr.bf16.gmra.mxu0 %v258
  %v354 = vpop.f32.mrf.mxu0
  %v355 = vadd.f32 %v120, %v354
  %v356 = vpop.f32.mrf.mxu0
  %v357 = vpop.f32.mrf.mxu0
  %v358 = vadd.f32 %v125, %v357
  %v359 = vpop.f32.mrf.mxu0
  %360 = vmatprep.mubr.bf16.mxu0 0
  %361 = vmatmul.mubr.bf16.gmra.mxu0 %v261
  %v362 = vpop.f32.mrf.mxu0
  %v363 = vadd.f32 %v130, %v362
  %v364 = vpop.f32.mrf.mxu0
  %v365 = vpop.f32.mrf.mxu0
  %v366 = vadd.f32 %v135, %v365
  %v367 = vpop.f32.mrf.mxu0
  %368 = vmatprep.mubr.bf16.mxu0 0
  %369 = vmatmul.mubr.bf16.gmra.mxu0 %v264
  %v370 = vpop.f32.mrf.mxu0
  %v371 = vadd.f32 %v140, %v370
  %v372 = vpop.f32.mrf.mxu0
  %v373 = vpop.f32.mrf.mxu0
  %v374 = vadd.f32 %v145, %v373
  %v375 = vpop.f32.mrf.mxu0
  %376 = vmatprep.mubr.bf16.mxu0 0
  %377 = vmatmul.mubr.bf16.gmra.mxu0 %v267
  %v378 = vpop.f32.mrf.mxu0
  %v379 = vadd.f32 %v150, %v378
  %v380 = vpop.f32.mrf.mxu0
  %v381 = vpop.f32.mrf.mxu0
  %v382 = vadd.f32 %v155, %v381
  %v383 = vpop.f32.mrf.mxu0
  %384 = vmatprep.mubr.bf16.mxu0 0
  %385 = vmatmul.mubr.bf16.gmra.mxu0 %v270
  %v386 = vpop.f32.mrf.mxu0
  %v387 = vadd.f32 %v160, %v386
  %v388 = vpop.f32.mrf.mxu0
  %v389 = vpop.f32.mrf.mxu0
  %v390 = vadd.f32 %v165, %v389
  %v391 = vpop.f32.mrf.mxu0
  %392 = vdwg.mxu0
  %v393 = vmax.f32 %v331, 0.0
  %v394 = vmax.f32 %v334, 0.0
  %v395 = vmax.f32 %v339, 0.0
  %v396 = vmax.f32 %v342, 0.0
  %v397 = vmax.f32 %v347, 0.0
  %v398 = vmax.f32 %v350, 0.0
  %v399 = vmax.f32 %v355, 0.0
  %v400 = vmax.f32 %v358, 0.0
  %v401 = vmax.f32 %v363, 0.0
  %v402 = vmax.f32 %v366, 0.0
  %v403 = vmax.f32 %v371, 0.0
  %v404 = vmax.f32 %v374, 0.0
  %v405 = vmax.f32 %v379, 0.0
  %v406 = vmax.f32 %v382, 0.0
  %v407 = vmax.f32 %v387, 0.0
  %v408 = vmax.f32 %v390, 0.0
  %v409 = vpack.c.bf16 %v394, %v393
  %v410 = vpack.c.bf16 %v396, %v395
  %v411 = vpack.c.bf16 %v398, %v397
  %v412 = vpack.c.bf16 %v400, %v399
  %v413 = vpack.c.bf16 %v402, %v401
  %v414 = vpack.c.bf16 %v404, %v403
  %v415 = vpack.c.bf16 %v406, %v405
  %v416 = vpack.c.bf16 %v408, %v407
  %v417 = vld [vmem:[%s3] sm:$0xf]
  %v418 = vld [vmem:[%s3 + $0x4] sm:$0xf]
  %v419 = vld [vmem:[%s3 + $0x8] sm:$0xf]
  %v420 = vld [vmem:[%s3 + $0xc] sm:$0xf]
  %v421 = vld [vmem:[%s3 + $0x10] sm:$0xf]
  %v422 = vld [vmem:[%s3 + $0x14] sm:$0xf]
  %v423 = vld [vmem:[%s3 + $0x18] sm:$0xf]
  %v424 = vld [vmem:[%s3 + $0x1c] sm:$0xf]
  %v425 = vld [vmem:[%s3 + $0x20] sm:$0xf]
  %v426 = vld [vmem:[%s3 + $0x24] sm:$0xf]
  %v427 = vld [vmem:[%s3 + $0x28] sm:$0xf]
  %v428 = vld [vmem:[%s3 + $0x2c] sm:$0xf]
  %v429 = vld [vmem:[%s3 + $0x30] sm:$0xf]
  %v430 = vld [vmem:[%s3 + $0x34] sm:$0xf]
  %v431 = vld [vmem:[%s3 + $0x38] sm:$0xf]
  %v432 = vld [vmem:[%s3 + $0x3c] sm:$0xf]
  %v433 = vld [vmem:[%s3 + $0x40] sm:$0xf]
  %v434 = vld [vmem:[%s3 + $0x44] sm:$0xf]
  %v435 = vld [vmem:[%s3 + $0x48] sm:$0xf]
  %v436 = vld [vmem:[%s3 + $0x4c] sm:$0xf]
  %v437 = vld [vmem:[%s3 + $0x50] sm:$0xf]
  %v438 = vld [vmem:[%s3 + $0x54] sm:$0xf]
  %v439 = vld [vmem:[%s3 + $0x58] sm:$0xf]
  %v440 = vld [vmem:[%s3 + $0x5c] sm:$0xf]
  %v441 = vld [vmem:[%s3 + $0x60] sm:$0xf]
  %v442 = vld [vmem:[%s3 + $0x64] sm:$0xf]
  %v443 = vld [vmem:[%s3 + $0x68] sm:$0xf]
  %v444 = vld [vmem:[%s3 + $0x6c] sm:$0xf]
  %v445 = vld [vmem:[%s3 + $0x70] sm:$0xf]
  %v446 = vld [vmem:[%s3 + $0x74] sm:$0xf]
  %v447 = vld [vmem:[%s3 + $0x78] sm:$0xf]
  %v448 = vld [vmem:[%s3 + $0x7c] sm:$0xf]
  %v449 = vld [vmem:[%s4] sm:$0xff]
  %v450 = vld [vmem:[%s4 + $0x8] sm:$0xff]
  %v451 = vld [vmem:[%s4 + $0x10] sm:$0xff]
  %v452 = vld [vmem:[%s4 + $0x18] sm:$0xff]
  %v453 = vld [vmem:[%s4 + $0x20] sm:$0xff]
  %v454 = vld [vmem:[%s4 + $0x28] sm:$0xff]
  %v455 = vld [vmem:[%s4 + $0x30] sm:$0xff]
  %v456 = vld [vmem:[%s4 + $0x38] sm:$0xff]
  %v457 = vld [vmem:[%s4 + $0x40] sm:$0xff]
  %v458 = vld [vmem:[%s4 + $0x48] sm:$0xff]
  %v459 = vld [vmem:[%s4 + $0x50] sm:$0xff]
  %v460 = vld [vmem:[%s4 + $0x58] sm:$0xff]
  %v461 = vld [vmem:[%s4 + $0x60] sm:$0xff]
  %v462 = vld [vmem:[%s4 + $0x68] sm:$0xff]
  %v463 = vld [vmem:[%s4 + $0x70] sm:$0xff]
  %v464 = vld [vmem:[%s4 + $0x78] sm:$0xff]
  %v465 = vld [vmem:[%s4 + $0x80] sm:$0xff]
  %v466 = vld [vmem:[%s4 + $0x88] sm:$0xff]
  %v467 = vld [vmem:[%s4 + $0x90] sm:$0xff]
  %v468 = vld [vmem:[%s4 + $0x98] sm:$0xff]
  %v469 = vld [vmem:[%s4 + $0xa0] sm:$0xff]
  %v470 = vld [vmem:[%s4 + $0xa8] sm:$0xff]
  %v471 = vld [vmem:[%s4 + $0xb0] sm:$0xff]
  %v472 = vld [vmem:[%s4 + $0xb8] sm:$0xff]
  %v473 = vld [vmem:[%s4 + $0xc0] sm:$0xff]
  %v474 = vld [vmem:[%s4 + $0xc8] sm:$0xff]
  %v475 = vld [vmem:[%s4 + $0xd0] sm:$0xff]
  %v476 = vld [vmem:[%s4 + $0xd8] sm:$0xff]
  %v477 = vld [vmem:[%s4 + $0xe0] sm:$0xff]
  %v478 = vld [vmem:[%s4 + $0xe8] sm:$0xff]
  %v479 = vld [vmem:[%s4 + $0xf0] sm:$0xff]
  %v480 = vld [vmem:[%s4 + $0xf8] sm:$0xff]
  %482 = vset.pattern.permute.xlu0 0
  %483 = vperm.xlu0 %482, %v449
  %v484 = vpop.permute.xlu0 %483
  %487 = vset.pattern.permute.xlu0 0
  %488 = vperm.xlu0 %487, %v450
  %v489 = vpop.permute.xlu0 %488
  %492 = vset.pattern.permute.xlu0 0
  %493 = vperm.xlu0 %492, %v451
  %v494 = vpop.permute.xlu0 %493
  %497 = vset.pattern.permute.xlu0 0
  %498 = vperm.xlu0 %497, %v452
  %v499 = vpop.permute.xlu0 %498
  %502 = vset.pattern.permute.xlu0 0
  %503 = vperm.xlu0 %502, %v453
  %v504 = vpop.permute.xlu0 %503
  %507 = vset.pattern.permute.xlu0 0
  %508 = vperm.xlu0 %507, %v454
  %v509 = vpop.permute.xlu0 %508
  %512 = vset.pattern.permute.xlu0 0
  %513 = vperm.xlu0 %512, %v455
  %v514 = vpop.permute.xlu0 %513
  %517 = vset.pattern.permute.xlu0 0
  %518 = vperm.xlu0 %517, %v456
  %v519 = vpop.permute.xlu0 %518
  %522 = vset.pattern.permute.xlu0 0
  %523 = vperm.xlu0 %522, %v457
  %v524 = vpop.permute.xlu0 %523
  %527 = vset.pattern.permute.xlu0 0
  %528 = vperm.xlu0 %527, %v458
  %v529 = vpop.permute.xlu0 %528
  %532 = vset.pattern.permute.xlu0 0
  %533 = vperm.xlu0 %532, %v459
  %v534 = vpop.permute.xlu0 %533
  %537 = vset.pattern.permute.xlu0 0
  %538 = vperm.xlu0 %537, %v460
  %v539 = vpop.permute.xlu0 %538
  %542 = vset.pattern.permute.xlu0 0
  %543 = vperm.xlu0 %542, %v461
  %v544 = vpop.permute.xlu0 %543
  %547 = vset.pattern.permute.xlu0 0
  %548 = vperm.xlu0 %547, %v462
  %v549 = vpop.permute.xlu0 %548
  %552 = vset.pattern.permute.xlu0 0
  %553 = vperm.xlu0 %552, %v463
  %v554 = vpop.permute.xlu0 %553
  %557 = vset.pattern.permute.xlu0 0
  %558 = vperm.xlu0 %557, %v464
  %v559 = vpop.permute.xlu0 %558
  %562 = vset.pattern.permute.xlu0 0
  %563 = vperm.xlu0 %562, %v465
  %v564 = vpop.permute.xlu0 %563
  %567 = vset.pattern.permute.xlu0 0
  %568 = vperm.xlu0 %567, %v466
  %v569 = vpop.permute.xlu0 %568
  %572 = vset.pattern.permute.xlu0 0
  %573 = vperm.xlu0 %572, %v467
  %v574 = vpop.permute.xlu0 %573
  %577 = vset.pattern.permute.xlu0 0
  %578 = vperm.xlu0 %577, %v468
  %v579 = vpop.permute.xlu0 %578
  %582 = vset.pattern.permute.xlu0 0
  %583 = vperm.xlu0 %582, %v469
  %v584 = vpop.permute.xlu0 %583
  %587 = vset.pattern.permute.xlu0 0
  %588 = vperm.xlu0 %587, %v470
  %v589 = vpop.permute.xlu0 %588
  %592 = vset.pattern.permute.xlu0 0
  %593 = vperm.xlu0 %592, %v471
  %v594 = vpop.permute.xlu0 %593
  %597 = vset.pattern.permute.xlu0 0
  %598 = vperm.xlu0 %597, %v472
  %v599 = vpop.permute.xlu0 %598
  %602 = vset.pattern.permute.xlu0 0
  %603 = vperm.xlu0 %602, %v473
  %v604 = vpop.permute.xlu0 %603
  %607 = vset.pattern.permute.xlu0 0
  %608 = vperm.xlu0 %607, %v474
  %v609 = vpop.permute.xlu0 %608
  %612 = vset.pattern.permute.xlu0 0
  %613 = vperm.xlu0 %612, %v475
  %v614 = vpop.permute.xlu0 %613
  %617 = vset.pattern.permute.xlu0 0
  %618 = vperm.xlu0 %617, %v476
  %v619 = vpop.permute.xlu0 %618
  %622 = vset.pattern.permute.xlu0 0
  %623 = vperm.xlu0 %622, %v477
  %v624 = vpop.permute.xlu0 %623
  %627 = vset.pattern.permute.xlu0 0
  %628 = vperm.xlu0 %627, %v478
  %v629 = vpop.permute.xlu0 %628
  %632 = vset.pattern.permute.xlu0 0
  %633 = vperm.xlu0 %632, %v479
  %v634 = vpop.permute.xlu0 %633
  %637 = vset.pattern.permute.xlu0 0
  %638 = vperm.xlu0 %637, %v480
  %v639 = vpop.permute.xlu0 %638
  %v673 = vunpack.c.l.b16 %v417
  %v674 = vunpack.c.l.b16 %v418
  %v675 = vunpack.c.l.b16 %v419
  %v676 = vunpack.c.l.b16 %v420
  %v677 = vunpack.c.l.b16 %v421
  %v678 = vunpack.c.l.b16 %v422
  %v679 = vunpack.c.l.b16 %v423
  %v680 = vunpack.c.l.b16 %v424
  %v681 = vunpack.c.l.b16 %v425
  %v682 = vunpack.c.l.b16 %v426
  %v683 = vunpack.c.l.b16 %v427
  %v684 = vunpack.c.l.b16 %v428
  %v685 = vunpack.c.l.b16 %v429
  %v686 = vunpack.c.l.b16 %v430
  %v687 = vunpack.c.l.b16 %v431
  %v688 = vunpack.c.l.b16 %v432
  %v689 = vunpack.c.l.b16 %v433
  %v690 = vunpack.c.l.b16 %v434
  %v691 = vunpack.c.l.b16 %v435
  %v692 = vunpack.c.l.b16 %v436
  %v693 = vunpack.c.l.b16 %v437
  %v694 = vunpack.c.l.b16 %v438
  %v695 = vunpack.c.l.b16 %v439
  %v696 = vunpack.c.l.b16 %v440
  %v697 = vunpack.c.l.b16 %v441
  %v698 = vunpack.c.l.b16 %v442
  %v699 = vunpack.c.l.b16 %v443
  %v700 = vunpack.c.l.b16 %v444
  %v701 = vunpack.c.l.b16 %v445
  %v702 = vunpack.c.l.b16 %v446
  %v703 = vunpack.c.l.b16 %v447
  %v704 = vunpack.c.l.b16 %v448
  %v705 = vpack.c.b16 %v674, %v673
  %v706 = vpack.c.b16 %v676, %v675
  %v707 = vpack.c.b16 %v678, %v677
  %v708 = vpack.c.b16 %v680, %v679
  %v709 = vpack.c.b16 %v682, %v681
  %v710 = vpack.c.b16 %v684, %v683
  %v711 = vpack.c.b16 %v686, %v685
  %v712 = vpack.c.b16 %v688, %v687
  %v713 = vpack.c.b16 %v690, %v689
  %v714 = vpack.c.b16 %v692, %v691
  %v715 = vpack.c.b16 %v694, %v693
  %v716 = vpack.c.b16 %v696, %v695
  %v717 = vpack.c.b16 %v698, %v697
  %v718 = vpack.c.b16 %v700, %v699
  %v719 = vpack.c.b16 %v702, %v701
  %v720 = vpack.c.b16 %v704, %v703
  %737 = vmatprep.subr.bf16.mxu0 0
  %738 = vmatpush1.bf16.msra.mxu0 %v416
  %739 = vmatprep.subr.bf16.mxu0 0
  %740 = vmatpush1.bf16.msra.mxu0 %v415
  %741 = vmatprep.subr.bf16.mxu0 0
  %742 = vmatpush1.bf16.msra.mxu0 %v414
  %743 = vmatprep.subr.bf16.mxu0 0
  %744 = vmatpush1.bf16.msra.mxu0 %v413
  %745 = vmatprep.subr.bf16.mxu0 0
  %746 = vmatpush1.bf16.msra.mxu0 %v412
  %747 = vmatprep.subr.bf16.mxu0 0
  %748 = vmatpush1.bf16.msra.mxu0 %v411
  %749 = vmatprep.subr.bf16.mxu0 0
  %750 = vmatpush1.bf16.msra.mxu0 %v410
  %751 = vmatprep.subr.bf16.mxu0 0
  %752 = vmatpush1.bf16.msra.mxu0 %v409
  %753 = vmatprep.subr.bf16.mxu0 0
  %754 = vmatpush2.bf16.msra.mxu0 0
  %755 = vmatprep.subr.bf16.mxu0 0
  %756 = vmatpush2.bf16.msra.mxu0 0
  %757 = vmatprep.subr.bf16.mxu0 0
  %758 = vmatpush2.bf16.msra.mxu0 0
  %759 = vmatprep.subr.bf16.mxu0 0
  %760 = vmatpush2.bf16.msra.mxu0 0
  %761 = vmatprep.subr.bf16.mxu0 0
  %762 = vmatpush2.bf16.msra.mxu0 0
  %763 = vmatprep.subr.bf16.mxu0 0
  %764 = vmatpush2.bf16.msra.mxu0 0
  %765 = vmatprep.subr.bf16.mxu0 0
  %766 = vmatpush2.bf16.msra.mxu0 0
  %767 = vmatprep.subr.bf16.mxu0 0
  %768 = vmatpush2.bf16.msra.mxu0 0
  %769 = vmatprep.mubr.bf16.mxu0 0
  %770 = vmatmul.mubr.bf16.gmra.mxu0 %v705
  %v771 = vpop.f32.mrf.mxu0
  %v772 = vadd.f32 %v484, %v771
  %v773 = vpop.f32.mrf.mxu0
  %v774 = vpop.f32.mrf.mxu0
  %v775 = vadd.f32 %v489, %v774
  %v776 = vpop.f32.mrf.mxu0
  %777 = vmatprep.mubr.bf16.mxu0 0
  %778 = vmatmul.mubr.bf16.gmra.mxu0 %v706
  %v779 = vpop.f32.mrf.mxu0
  %v780 = vadd.f32 %v494, %v779
  %v781 = vpop.f32.mrf.mxu0
  %v782 = vpop.f32.mrf.mxu0
  %v783 = vadd.f32 %v499, %v782
  %v784 = vpop.f32.mrf.mxu0
  %785 = vmatprep.mubr.bf16.mxu0 0
  %786 = vmatmul.mubr.bf16.gmra.mxu0 %v707
  %v787 = vpop.f32.mrf.mxu0
  %v788 = vadd.f32 %v504, %v787
  %v789 = vpop.f32.mrf.mxu0
  %v790 = vpop.f32.mrf.mxu0
  %v791 = vadd.f32 %v509, %v790
  %v792 = vpop.f32.mrf.mxu0
  %793 = vmatprep.mubr.bf16.mxu0 0
  %794 = vmatmul.mubr.bf16.gmra.mxu0 %v708
  %v795 = vpop.f32.mrf.mxu0
  %v796 = vadd.f32 %v514, %v795
  %v797 = vpop.f32.mrf.mxu0
  %v798 = vpop.f32.mrf.mxu0
  %v799 = vadd.f32 %v519, %v798
  %v800 = vpop.f32.mrf.mxu0
  %801 = vmatprep.mubr.bf16.mxu0 0
  %802 = vmatmul.mubr.bf16.gmra.mxu0 %v709
  %v803 = vpop.f32.mrf.mxu0
  %v804 = vadd.f32 %v524, %v803
  %v805 = vpop.f32.mrf.mxu0
  %v806 = vpop.f32.mrf.mxu0
  %v807 = vadd.f32 %v529, %v806
  %v808 = vpop.f32.mrf.mxu0
  %809 = vmatprep.mubr.bf16.mxu0 0
  %810 = vmatmul.mubr.bf16.gmra.mxu0 %v710
  %v811 = vpop.f32.mrf.mxu0
  %v812 = vadd.f32 %v534, %v811
  %v813 = vpop.f32.mrf.mxu0
  %v814 = vpop.f32.mrf.mxu0
  %v815 = vadd.f32 %v539, %v814
  %v816 = vpop.f32.mrf.mxu0
  %817 = vmatprep.mubr.bf16.mxu0 0
  %818 = vmatmul.mubr.bf16.gmra.mxu0 %v711
  %v819 = vpop.f32.mrf.mxu0
  %v820 = vadd.f32 %v544, %v819
  %v821 = vpop.f32.mrf.mxu0
  %v822 = vpop.f32.mrf.mxu0
  %v823 = vadd.f32 %v549, %v822
  %v824 = vpop.f32.mrf.mxu0
  %825 = vmatprep.mubr.bf16.mxu0 0
  %826 = vmatmul.mubr.bf16.gmra.mxu0 %v712
  %v827 = vpop.f32.mrf.mxu0
  %v828 = vadd.f32 %v554, %v827
  %v829 = vpop.f32.mrf.mxu0
  %v830 = vpop.f32.mrf.mxu0
  %v831 = vadd.f32 %v559, %v830
  %v832 = vpop.f32.mrf.mxu0
  %833 = vmatprep.mubr.bf16.mxu0 0
  %834 = vmatmul.mubr.bf16.gmra.mxu0 %v713
  %v835 = vpop.f32.mrf.mxu0
  %v836 = vadd.f32 %v564, %v835
  %v837 = vpop.f32.mrf.mxu0
  %v838 = vpop.f32.mrf.mxu0
  %v839 = vadd.f32 %v569, %v838
  %v840 = vpop.f32.mrf.mxu0
  %841 = vmatprep.mubr.bf16.mxu0 0
  %842 = vmatmul.mubr.bf16.gmra.mxu0 %v714
  %v843 = vpop.f32.mrf.mxu0
  %v844 = vadd.f32 %v574, %v843
  %v845 = vpop.f32.mrf.mxu0
  %v846 = vpop.f32.mrf.mxu0
  %v847 = vadd.f32 %v579, %v846
  %v848 = vpop.f32.mrf.mxu0
  %849 = vmatprep.mubr.bf16.mxu0 0
  %850 = vmatmul.mubr.bf16.gmra.mxu0 %v715
  %v851 = vpop.f32.mrf.mxu0
  %v852 = vadd.f32 %v584, %v851
  %v853 = vpop.f32.mrf.mxu0
  %v854 = vpop.f32.mrf.mxu0
  %v855 = vadd.f32 %v589, %v854
  %v856 = vpop.f32.mrf.mxu0
  %857 = vmatprep.mubr.bf16.mxu0 0
  %858 = vmatmul.mubr.bf16.gmra.mxu0 %v716
  %v859 = vpop.f32.mrf.mxu0
  %v860 = vadd.f32 %v594, %v859
  %v861 = vpop.f32.mrf.mxu0
  %v862 = vpop.f32.mrf.mxu0
  %v863 = vadd.f32 %v599, %v862
  %v864 = vpop.f32.mrf.mxu0
  %865 = vmatprep.mubr.bf16.mxu0 0
  %866 = vmatmul.mubr.bf16.gmra.mxu0 %v717
  %v867 = vpop.f32.mrf.mxu0
  %v868 = vadd.f32 %v604, %v867
  %v869 = vpop.f32.mrf.mxu0
  %v870 = vpop.f32.mrf.mxu0
  %v871 = vadd.f32 %v609, %v870
  %v872 = vpop.f32.mrf.mxu0
  %873 = vmatprep.mubr.bf16.mxu0 0
  %874 = vmatmul.mubr.bf16.gmra.mxu0 %v718
  %v875 = vpop.f32.mrf.mxu0
  %v876 = vadd.f32 %v614, %v875
  %v877 = vpop.f32.mrf.mxu0
  %v878 = vpop.f32.mrf.mxu0
  %v879 = vadd.f32 %v619, %v878
  %v880 = vpop.f32.mrf.mxu0
  %881 = vmatprep.mubr.bf16.mxu0 0
  %882 = vmatmul.mubr.bf16.gmra.mxu0 %v719
  %v883 = vpop.f32.mrf.mxu0
  %v884 = vadd.f32 %v624, %v883
  %v885 = vpop.f32.mrf.mxu0
  %v886 = vpop.f32.mrf.mxu0
  %v887 = vadd.f32 %v629, %v886
  %v888 = vpop.f32.mrf.mxu0
  %889 = vmatprep.mubr.bf16.mxu0 0
  %890 = vmatmul.mubr.bf16.gmra.mxu0 %v720
  %v891 = vpop.f32.mrf.mxu0
  %v892 = vadd.f32 %v634, %v891
  %v893 = vpop.f32.mrf.mxu0
  %v894 = vpop.f32.mrf.mxu0
  %v895 = vadd.f32 %v639, %v894
  %v896 = vpop.f32.mrf.mxu0
  %897 = vdwg.mxu0
  %v898 = vmax.f32 %v772, 0.0
  %v899 = vmax.f32 %v775, 0.0
  %v900 = vmax.f32 %v780, 0.0
  %v901 = vmax.f32 %v783, 0.0
  %v902 = vmax.f32 %v788, 0.0
  %v903 = vmax.f32 %v791, 0.0
  %v904 = vmax.f32 %v796, 0.0
  %v905 = vmax.f32 %v799, 0.0
  %v906 = vmax.f32 %v804, 0.0
  %v907 = vmax.f32 %v807, 0.0
  %v908 = vmax.f32 %v812, 0.0
  %v909 = vmax.f32 %v815, 0.0
  %v910 = vmax.f32 %v820, 0.0
  %v911 = vmax.f32 %v823, 0.0
  %v912 = vmax.f32 %v828, 0.0
  %v913 = vmax.f32 %v831, 0.0
  %v914 = vmax.f32 %v836, 0.0
  %v915 = vmax.f32 %v839, 0.0
  %v916 = vmax.f32 %v844, 0.0
  %v917 = vmax.f32 %v847, 0.0
  %v918 = vmax.f32 %v852, 0.0
  %v919 = vmax.f32 %v855, 0.0
  %v920 = vmax.f32 %v860, 0.0
  %v921 = vmax.f32 %v863, 0.0
  %v922 = vmax.f32 %v868, 0.0
  %v923 = vmax.f32 %v871, 0.0
  %v924 = vmax.f32 %v876, 0.0
  %v925 = vmax.f32 %v879, 0.0
  %v926 = vmax.f32 %v884, 0.0
  %v927 = vmax.f32 %v887, 0.0
  %v928 = vmax.f32 %v892, 0.0
  %v929 = vmax.f32 %v895, 0.0
  %v930 = vpack.c.bf16 %v899, %v898
  %v931 = vpack.c.bf16 %v901, %v900
  %v932 = vpack.c.bf16 %v903, %v902
  %v933 = vpack.c.bf16 %v905, %v904
  %v934 = vpack.c.bf16 %v907, %v906
  %v935 = vpack.c.bf16 %v909, %v908
  %v936 = vpack.c.bf16 %v911, %v910
  %v937 = vpack.c.bf16 %v913, %v912
  %v938 = vpack.c.bf16 %v915, %v914
  %v939 = vpack.c.bf16 %v917, %v916
  %v940 = vpack.c.bf16 %v919, %v918
  %v941 = vpack.c.bf16 %v921, %v920
  %v942 = vpack.c.bf16 %v923, %v922
  %v943 = vpack.c.bf16 %v925, %v924
  %v944 = vpack.c.bf16 %v927, %v926
  %v945 = vpack.c.bf16 %v929, %v928
  %v946 = vld [vmem:[%s5] sm:$0xff]
  %v947 = vld [vmem:[%s5 + $0x8] sm:$0xff]
  %v948 = vld [vmem:[%s5 + $0x10] sm:$0xff]
  %v949 = vld [vmem:[%s5 + $0x18] sm:$0xff]
  %v950 = vld [vmem:[%s5 + $0x20] sm:$0xff]
  %v951 = vld [vmem:[%s5 + $0x28] sm:$0xff]
  %v952 = vld [vmem:[%s5 + $0x30] sm:$0xff]
  %v953 = vld [vmem:[%s5 + $0x38] sm:$0xff]
  %v954 = vld [vmem:[%s5 + $0x40] sm:$0xff]
  %v955 = vld [vmem:[%s5 + $0x48] sm:$0xff]
  %v956 = vld [vmem:[%s5 + $0x50] sm:$0xff]
  %v957 = vld [vmem:[%s5 + $0x58] sm:$0xff]
  %v958 = vld [vmem:[%s5 + $0x60] sm:$0xff]
  %v959 = vld [vmem:[%s5 + $0x68] sm:$0xff]
  %v960 = vld [vmem:[%s5 + $0x70] sm:$0xff]
  %v961 = vld [vmem:[%s5 + $0x78] sm:$0xff]
  %v962 = vld [vmem:[%s6] sm:$0xff]
  %v963 = vld [vmem:[%s6 + $0x8] sm:$0xff]
  %v964 = vld [vmem:[%s6 + $0x10] sm:$0xff]
  %v965 = vld [vmem:[%s6 + $0x18] sm:$0xff]
  %v966 = vld [vmem:[%s6 + $0x20] sm:$0xff]
  %v967 = vld [vmem:[%s6 + $0x28] sm:$0xff]
  %v968 = vld [vmem:[%s6 + $0x30] sm:$0xff]
  %v969 = vld [vmem:[%s6 + $0x38] sm:$0xff]
  %v970 = vld [vmem:[%s6 + $0x40] sm:$0xff]
  %v971 = vld [vmem:[%s6 + $0x48] sm:$0xff]
  %v972 = vld [vmem:[%s6 + $0x50] sm:$0xff]
  %v973 = vld [vmem:[%s6 + $0x58] sm:$0xff]
  %v974 = vld [vmem:[%s6 + $0x60] sm:$0xff]
  %v975 = vld [vmem:[%s6 + $0x68] sm:$0xff]
  %v976 = vld [vmem:[%s6 + $0x70] sm:$0xff]
  %v977 = vld [vmem:[%s6 + $0x78] sm:$0xff]
  %979 = vset.pattern.permute.xlu0 0
  %980 = vperm.xlu0 %979, %v962
  %v981 = vpop.permute.xlu0 %980
  %984 = vset.pattern.permute.xlu0 0
  %985 = vperm.xlu0 %984, %v963
  %v986 = vpop.permute.xlu0 %985
  %989 = vset.pattern.permute.xlu0 0
  %990 = vperm.xlu0 %989, %v964
  %v991 = vpop.permute.xlu0 %990
  %994 = vset.pattern.permute.xlu0 0
  %995 = vperm.xlu0 %994, %v965
  %v996 = vpop.permute.xlu0 %995
  %999 = vset.pattern.permute.xlu0 0
  %1000 = vperm.xlu0 %999, %v966
  %v1001 = vpop.permute.xlu0 %1000
  %1004 = vset.pattern.permute.xlu0 0
  %1005 = vperm.xlu0 %1004, %v967
  %v1006 = vpop.permute.xlu0 %1005
  %1009 = vset.pattern.permute.xlu0 0
  %1010 = vperm.xlu0 %1009, %v968
  %v1011 = vpop.permute.xlu0 %1010
  %1014 = vset.pattern.permute.xlu0 0
  %1015 = vperm.xlu0 %1014, %v969
  %v1016 = vpop.permute.xlu0 %1015
  %1019 = vset.pattern.permute.xlu0 0
  %1020 = vperm.xlu0 %1019, %v970
  %v1021 = vpop.permute.xlu0 %1020
  %1024 = vset.pattern.permute.xlu0 0
  %1025 = vperm.xlu0 %1024, %v971
  %v1026 = vpop.permute.xlu0 %1025
  %1029 = vset.pattern.permute.xlu0 0
  %1030 = vperm.xlu0 %1029, %v972
  %v1031 = vpop.permute.xlu0 %1030
  %1034 = vset.pattern.permute.xlu0 0
  %1035 = vperm.xlu0 %1034, %v973
  %v1036 = vpop.permute.xlu0 %1035
  %1039 = vset.pattern.permute.xlu0 0
  %1040 = vperm.xlu0 %1039, %v974
  %v1041 = vpop.permute.xlu0 %1040
  %1044 = vset.pattern.permute.xlu0 0
  %1045 = vperm.xlu0 %1044, %v975
  %v1046 = vpop.permute.xlu0 %1045
  %1049 = vset.pattern.permute.xlu0 0
  %1050 = vperm.xlu0 %1049, %v976
  %v1051 = vpop.permute.xlu0 %1050
  %1054 = vset.pattern.permute.xlu0 0
  %1055 = vperm.xlu0 %1054, %v977
  %v1056 = vpop.permute.xlu0 %1055
  %v1074 = vunpack.c.l.b16 %v946
  %v1075 = vunpack.c.h.b16 %v946
  %v1076 = vunpack.c.l.b16 %v947
  %v1077 = vunpack.c.h.b16 %v947
  %v1078 = vunpack.c.l.b16 %v948
  %v1079 = vunpack.c.h.b16 %v948
  %v1080 = vunpack.c.l.b16 %v949
  %v1081 = vunpack.c.h.b16 %v949
  %v1082 = vunpack.c.l.b16 %v950
  %v1083 = vunpack.c.h.b16 %v950
  %v1084 = vunpack.c.l.b16 %v951
  %v1085 = vunpack.c.h.b16 %v951
  %v1086 = vunpack.c.l.b16 %v952
  %v1087 = vunpack.c.h.b16 %v952
  %v1088 = vunpack.c.l.b16 %v953
  %v1089 = vunpack.c.h.b16 %v953
  %v1090 = vunpack.c.l.b16 %v954
  %v1091 = vunpack.c.h.b16 %v954
  %v1092 = vunpack.c.l.b16 %v955
  %v1093 = vunpack.c.h.b16 %v955
  %v1094 = vunpack.c.l.b16 %v956
  %v1095 = vunpack.c.h.b16 %v956
  %v1096 = vunpack.c.l.b16 %v957
  %v1097 = vunpack.c.h.b16 %v957
  %v1098 = vunpack.c.l.b16 %v958
  %v1099 = vunpack.c.h.b16 %v958
  %v1100 = vunpack.c.l.b16 %v959
  %v1101 = vunpack.c.h.b16 %v959
  %v1102 = vunpack.c.l.b16 %v960
  %v1103 = vunpack.c.h.b16 %v960
  %v1104 = vunpack.c.l.b16 %v961
  %v1105 = vunpack.c.h.b16 %v961
  %v1106 = vpack.c.b16 %v1076, %v1074
  %v1107 = vpack.c.b16 %v1077, %v1075
  %v1108 = vpack.c.b16 %v1080, %v1078
  %v1109 = vpack.c.b16 %v1081, %v1079
  %v1110 = vpack.c.b16 %v1084, %v1082
  %v1111 = vpack.c.b16 %v1085, %v1083
  %v1112 = vpack.c.b16 %v1088, %v1086
  %v1113 = vpack.c.b16 %v1089, %v1087
  %v1114 = vpack.c.b16 %v1092, %v1090
  %v1115 = vpack.c.b16 %v1093, %v1091
  %v1116 = vpack.c.b16 %v1096, %v1094
  %v1117 = vpack.c.b16 %v1097, %v1095
  %v1118 = vpack.c.b16 %v1100, %v1098
  %v1119 = vpack.c.b16 %v1101, %v1099
  %v1120 = vpack.c.b16 %v1104, %v1102
  %v1121 = vpack.c.b16 %v1105, %v1103
  %1138 = vmatprep.subr.bf16.mxu0 0
  %1139 = vmatpush1.bf16.msra.mxu0 %v937
  %1140 = vmatprep.subr.bf16.mxu0 0
  %1141 = vmatpush1.bf16.msra.mxu0 %v936
  %1142 = vmatprep.subr.bf16.mxu0 0
  %1143 = vmatpush1.bf16.msra.mxu0 %v935
  %1144 = vmatprep.subr.bf16.mxu0 0
  %1145 = vmatpush1.bf16.msra.mxu0 %v934
  %1146 = vmatprep.subr.bf16.mxu0 0
  %1147 = vmatpush1.bf16.msra.mxu0 %v933
  %1148 = vmatprep.subr.bf16.mxu0 0
  %1149 = vmatpush1.bf16.msra.mxu0 %v932
  %1150 = vmatprep.subr.bf16.mxu0 0
  %1151 = vmatpush1.bf16.msra.mxu0 %v931
  %1152 = vmatprep.subr.bf16.mxu0 0
  %1153 = vmatpush1.bf16.msra.mxu0 %v930
  %1154 = vmatprep.subr.bf16.mxu0 0
  %1155 = vmatpush2.bf16.msra.mxu0 %v945
  %1156 = vmatprep.subr.bf16.mxu0 0
  %1157 = vmatpush2.bf16.msra.mxu0 %v944
  %1158 = vmatprep.subr.bf16.mxu0 0
  %1159 = vmatpush2.bf16.msra.mxu0 %v943
  %1160 = vmatprep.subr.bf16.mxu0 0
  %1161 = vmatpush2.bf16.msra.mxu0 %v942
  %1162 = vmatprep.subr.bf16.mxu0 0
  %1163 = vmatpush2.bf16.msra.mxu0 %v941
  %1164 = vmatprep.subr.bf16.mxu0 0
  %1165 = vmatpush2.bf16.msra.mxu0 %v940
  %1166 = vmatprep.subr.bf16.mxu0 0
  %1167 = vmatpush2.bf16.msra.mxu0 %v939
  %1168 = vmatprep.subr.bf16.mxu0 0
  %1169 = vmatpush2.bf16.msra.mxu0 %v938
  %1170 = vmatprep.mubr.bf16.mxu0 %v1107
  %1171 = vmatmul.mubr.bf16.gmra.mxu0 %v1106
  %v1172 = vpop.f32.mrf.mxu0
  %v1173 = vadd.f32 %v981, %v1172
  %v1174 = vpop.f32.mrf.mxu0
  %v1175 = vpop.f32.mrf.mxu0
  %v1176 = vadd.f32 %v986, %v1175
  %v1177 = vpop.f32.mrf.mxu0
  %1178 = vmatprep.mubr.bf16.mxu0 %v1109
  %1179 = vmatmul.mubr.bf16.gmra.mxu0 %v1108
  %v1180 = vpop.f32.mrf.mxu0
  %v1181 = vadd.f32 %v991, %v1180
  %v1182 = vpop.f32.mrf.mxu0
  %v1183 = vpop.f32.mrf.mxu0
  %v1184 = vadd.f32 %v996, %v1183
  %v1185 = vpop.f32.mrf.mxu0
  %1186 = vmatprep.mubr.bf16.mxu0 %v1111
  %1187 = vmatmul.mubr.bf16.gmra.mxu0 %v1110
  %v1188 = vpop.f32.mrf.mxu0
  %v1189 = vadd.f32 %v1001, %v1188
  %v1190 = vpop.f32.mrf.mxu0
  %v1191 = vpop.f32.mrf.mxu0
  %v1192 = vadd.f32 %v1006, %v1191
  %v1193 = vpop.f32.mrf.mxu0
  %1194 = vmatprep.mubr.bf16.mxu0 %v1113
  %1195 = vmatmul.mubr.bf16.gmra.mxu0 %v1112
  %v1196 = vpop.f32.mrf.mxu0
  %v1197 = vadd.f32 %v1011, %v1196
  %v1198 = vpop.f32.mrf.mxu0
  %v1199 = vpop.f32.mrf.mxu0
  %v1200 = vadd.f32 %v1016, %v1199
  %v1201 = vpop.f32.mrf.mxu0
  %1202 = vmatprep.mubr.bf16.mxu0 %v1115
  %1203 = vmatmul.mubr.bf16.gmra.mxu0 %v1114
  %v1204 = vpop.f32.mrf.mxu0
  %v1205 = vadd.f32 %v1021, %v1204
  %v1206 = vpop.f32.mrf.mxu0
  %v1207 = vpop.f32.mrf.mxu0
  %v1208 = vadd.f32 %v1026, %v1207
  %v1209 = vpop.f32.mrf.mxu0
  %1210 = vmatprep.mubr.bf16.mxu0 %v1117
  %1211 = vmatmul.mubr.bf16.gmra.mxu0 %v1116
  %v1212 = vpop.f32.mrf.mxu0
  %v1213 = vadd.f32 %v1031, %v1212
  %v1214 = vpop.f32.mrf.mxu0
  %v1215 = vpop.f32.mrf.mxu0
  %v1216 = vadd.f32 %v1036, %v1215
  %v1217 = vpop.f32.mrf.mxu0
  %1218 = vmatprep.mubr.bf16.mxu0 %v1119
  %1219 = vmatmul.mubr.bf16.gmra.mxu0 %v1118
  %v1220 = vpop.f32.mrf.mxu0
  %v1221 = vadd.f32 %v1041, %v1220
  %v1222 = vpop.f32.mrf.mxu0
  %v1223 = vpop.f32.mrf.mxu0
  %v1224 = vadd.f32 %v1046, %v1223
  %v1225 = vpop.f32.mrf.mxu0
  %1226 = vmatprep.mubr.bf16.mxu0 %v1121
  %1227 = vmatmul.mubr.bf16.gmra.mxu0 %v1120
  %v1228 = vpop.f32.mrf.mxu0
  %v1229 = vadd.f32 %v1051, %v1228
  %v1230 = vpop.f32.mrf.mxu0
  %v1231 = vpop.f32.mrf.mxu0
  %v1232 = vadd.f32 %v1056, %v1231
  %v1233 = vpop.f32.mrf.mxu0
  %1234 = vdwg.mxu0
  %v1235 = vmax.f32 %v1173, 0.0
  %v1236 = vmax.f32 %v1176, 0.0
  %v1237 = vmax.f32 %v1181, 0.0
  %v1238 = vmax.f32 %v1184, 0.0
  %v1239 = vmax.f32 %v1189, 0.0
  %v1240 = vmax.f32 %v1192, 0.0
  %v1241 = vmax.f32 %v1197, 0.0
  %v1242 = vmax.f32 %v1200, 0.0
  %v1243 = vmax.f32 %v1205, 0.0
  %v1244 = vmax.f32 %v1208, 0.0
  %v1245 = vmax.f32 %v1213, 0.0
  %v1246 = vmax.f32 %v1216, 0.0
  %v1247 = vmax.f32 %v1221, 0.0
  %v1248 = vmax.f32 %v1224, 0.0
  %v1249 = vmax.f32 %v1229, 0.0
  %v1250 = vmax.f32 %v1232, 0.0
  %v1251 = vpack.c.bf16 %v1236, %v1235
  %v1252 = vpack.c.bf16 %v1238, %v1237
  %v1253 = vpack.c.bf16 %v1240, %v1239
  %v1254 = vpack.c.bf16 %v1242, %v1241
  %v1255 = vpack.c.bf16 %v1244, %v1243
  %v1256 = vpack.c.bf16 %v1246, %v1245
  %v1257 = vpack.c.bf16 %v1248, %v1247
  %v1258 = vpack.c.bf16 %v1250, %v1249
  %v1259 = vld [vmem:[%s7] sm:$0xf]
  %v1260 = vld [vmem:[%s7 + $0x4] sm:$0xf]
  %v1261 = vld [vmem:[%s7 + $0x8] sm:$0xf]
  %v1262 = vld [vmem:[%s7 + $0xc] sm:$0xf]
  %v1263 = vld [vmem:[%s7 + $0x10] sm:$0xf]
  %v1264 = vld [vmem:[%s7 + $0x14] sm:$0xf]
  %v1265 = vld [vmem:[%s7 + $0x18] sm:$0xf]
  %v1266 = vld [vmem:[%s7 + $0x1c] sm:$0xf]
  %v1267 = vld [vmem:[%s7 + $0x20] sm:$0xf]
  %v1268 = vld [vmem:[%s7 + $0x24] sm:$0xf]
  %v1269 = vld [vmem:[%s7 + $0x28] sm:$0xf]
  %v1270 = vld [vmem:[%s7 + $0x2c] sm:$0xf]
  %v1271 = vld [vmem:[%s7 + $0x30] sm:$0xf]
  %v1272 = vld [vmem:[%s7 + $0x34] sm:$0xf]
  %v1273 = vld [vmem:[%s7 + $0x38] sm:$0xf]
  %v1274 = vld [vmem:[%s7 + $0x3c] sm:$0xf]
  %v1275 = vld [vmem:[%s8] sm:$0xff]
  %v1276 = vld [vmem:[%s8 + $0x8] sm:$0xff]
  %v1277 = vld [vmem:[%s8 + $0x10] sm:$0xff]
  %v1278 = vld [vmem:[%s8 + $0x18] sm:$0xff]
  %v1279 = vld [vmem:[%s8 + $0x20] sm:$0xff]
  %v1280 = vld [vmem:[%s8 + $0x28] sm:$0xff]
  %v1281 = vld [vmem:[%s8 + $0x30] sm:$0xff]
  %v1282 = vld [vmem:[%s8 + $0x38] sm:$0xff]
  %v1283 = vld [vmem:[%s8 + $0x40] sm:$0xff]
  %v1284 = vld [vmem:[%s8 + $0x48] sm:$0xff]
  %v1285 = vld [vmem:[%s8 + $0x50] sm:$0xff]
  %v1286 = vld [vmem:[%s8 + $0x58] sm:$0xff]
  %v1287 = vld [vmem:[%s8 + $0x60] sm:$0xff]
  %v1288 = vld [vmem:[%s8 + $0x68] sm:$0xff]
  %v1289 = vld [vmem:[%s8 + $0x70] sm:$0xff]
  %v1290 = vld [vmem:[%s8 + $0x78] sm:$0xff]
  %1292 = vset.pattern.permute.xlu0 0
  %1293 = vperm.xlu0 %1292, %v1275
  %v1294 = vpop.permute.xlu0 %1293
  %1297 = vset.pattern.permute.xlu0 0
  %1298 = vperm.xlu0 %1297, %v1276
  %v1299 = vpop.permute.xlu0 %1298
  %1302 = vset.pattern.permute.xlu0 0
  %1303 = vperm.xlu0 %1302, %v1277
  %v1304 = vpop.permute.xlu0 %1303
  %1307 = vset.pattern.permute.xlu0 0
  %1308 = vperm.xlu0 %1307, %v1278
  %v1309 = vpop.permute.xlu0 %1308
  %1312 = vset.pattern.permute.xlu0 0
  %1313 = vperm.xlu0 %1312, %v1279
  %v1314 = vpop.permute.xlu0 %1313
  %1317 = vset.pattern.permute.xlu0 0
  %1318 = vperm.xlu0 %1317, %v1280
  %v1319 = vpop.permute.xlu0 %1318
  %1322 = vset.pattern.permute.xlu0 0
  %1323 = vperm.xlu0 %1322, %v1281
  %v1324 = vpop.permute.xlu0 %1323
  %1327 = vset.pattern.permute.xlu0 0
  %1328 = vperm.xlu0 %1327, %v1282
  %v1329 = vpop.permute.xlu0 %1328
  %1332 = vset.pattern.permute.xlu0 0
  %1333 = vperm.xlu0 %1332, %v1283
  %v1334 = vpop.permute.xlu0 %1333
  %1337 = vset.pattern.permute.xlu0 0
  %1338 = vperm.xlu0 %1337, %v1284
  %v1339 = vpop.permute.xlu0 %1338
  %1342 = vset.pattern.permute.xlu0 0
  %1343 = vperm.xlu0 %1342, %v1285
  %v1344 = vpop.permute.xlu0 %1343
  %1347 = vset.pattern.permute.xlu0 0
  %1348 = vperm.xlu0 %1347, %v1286
  %v1349 = vpop.permute.xlu0 %1348
  %1352 = vset.pattern.permute.xlu0 0
  %1353 = vperm.xlu0 %1352, %v1287
  %v1354 = vpop.permute.xlu0 %1353
  %1357 = vset.pattern.permute.xlu0 0
  %1358 = vperm.xlu0 %1357, %v1288
  %v1359 = vpop.permute.xlu0 %1358
  %1362 = vset.pattern.permute.xlu0 0
  %1363 = vperm.xlu0 %1362, %v1289
  %v1364 = vpop.permute.xlu0 %1363
  %1367 = vset.pattern.permute.xlu0 0
  %1368 = vperm.xlu0 %1367, %v1290
  %v1369 = vpop.permute.xlu0 %1368
  %v1387 = vunpack.c.l.b16 %v1259
  %v1388 = vunpack.c.l.b16 %v1260
  %v1389 = vunpack.c.l.b16 %v1261
  %v1390 = vunpack.c.l.b16 %v1262
  %v1391 = vunpack.c.l.b16 %v1263
  %v1392 = vunpack.c.l.b16 %v1264
  %v1393 = vunpack.c.l.b16 %v1265
  %v1394 = vunpack.c.l.b16 %v1266
  %v1395 = vunpack.c.l.b16 %v1267
  %v1396 = vunpack.c.l.b16 %v1268
  %v1397 = vunpack.c.l.b16 %v1269
  %v1398 = vunpack.c.l.b16 %v1270
  %v1399 = vunpack.c.l.b16 %v1271
  %v1400 = vunpack.c.l.b16 %v1272
  %v1401 = vunpack.c.l.b16 %v1273
  %v1402 = vunpack.c.l.b16 %v1274
  %v1403 = vpack.c.b16 %v1388, %v1387
  %v1404 = vpack.c.b16 %v1390, %v1389
  %v1405 = vpack.c.b16 %v1392, %v1391
  %v1406 = vpack.c.b16 %v1394, %v1393
  %v1407 = vpack.c.b16 %v1396, %v1395
  %v1408 = vpack.c.b16 %v1398, %v1397
  %v1409 = vpack.c.b16 %v1400, %v1399
  %v1410 = vpack.c.b16 %v1402, %v1401
  %1419 = vmatprep.subr.bf16.mxu0 0
  %1420 = vmatpush1.bf16.msra.mxu0 %v1258
  %1421 = vmatprep.subr.bf16.mxu0 0
  %1422 = vmatpush1.bf16.msra.mxu0 %v1257
  %1423 = vmatprep.subr.bf16.mxu0 0
  %1424 = vmatpush1.bf16.msra.mxu0 %v1256
  %1425 = vmatprep.subr.bf16.mxu0 0
  %1426 = vmatpush1.bf16.msra.mxu0 %v1255
  %1427 = vmatprep.subr.bf16.mxu0 0
  %1428 = vmatpush1.bf16.msra.mxu0 %v1254
  %1429 = vmatprep.subr.bf16.mxu0 0
  %1430 = vmatpush1.bf16.msra.mxu0 %v1253
  %1431 = vmatprep.subr.bf16.mxu0 0
  %1432 = vmatpush1.bf16.msra.mxu0 %v1252
  %1433 = vmatprep.subr.bf16.mxu0 0
  %1434 = vmatpush1.bf16.msra.mxu0 %v1251
  %1435 = vmatprep.subr.bf16.mxu0 0
  %1436 = vmatpush2.bf16.msra.mxu0 0
  %1437 = vmatprep.subr.bf16.mxu0 0
  %1438 = vmatpush2.bf16.msra.mxu0 0
  %1439 = vmatprep.subr.bf16.mxu0 0
  %1440 = vmatpush2.bf16.msra.mxu0 0
  %1441 = vmatprep.subr.bf16.mxu0 0
  %1442 = vmatpush2.bf16.msra.mxu0 0
  %1443 = vmatprep.subr.bf16.mxu0 0
  %1444 = vmatpush2.bf16.msra.mxu0 0
  %1445 = vmatprep.subr.bf16.mxu0 0
  %1446 = vmatpush2.bf16.msra.mxu0 0
  %1447 = vmatprep.subr.bf16.mxu0 0
  %1448 = vmatpush2.bf16.msra.mxu0 0
  %1449 = vmatprep.subr.bf16.mxu0 0
  %1450 = vmatpush2.bf16.msra.mxu0 0
  %1451 = vmatprep.mubr.bf16.mxu0 0
  %1452 = vmatmul.mubr.bf16.gmra.mxu0 %v1403
  %v1453 = vpop.f32.mrf.mxu0
  %v1454 = vadd.f32 %v1294, %v1453
  %v1455 = vpop.f32.mrf.mxu0
  %v1456 = vpop.f32.mrf.mxu0
  %v1457 = vadd.f32 %v1299, %v1456
  %v1458 = vpop.f32.mrf.mxu0
  %1459 = vmatprep.mubr.bf16.mxu0 0
  %1460 = vmatmul.mubr.bf16.gmra.mxu0 %v1404
  %v1461 = vpop.f32.mrf.mxu0
  %v1462 = vadd.f32 %v1304, %v1461
  %v1463 = vpop.f32.mrf.mxu0
  %v1464 = vpop.f32.mrf.mxu0
  %v1465 = vadd.f32 %v1309, %v1464
  %v1466 = vpop.f32.mrf.mxu0
  %1467 = vmatprep.mubr.bf16.mxu0 0
  %1468 = vmatmul.mubr.bf16.gmra.mxu0 %v1405
  %v1469 = vpop.f32.mrf.mxu0
  %v1470 = vadd.f32 %v1314, %v1469
  %v1471 = vpop.f32.mrf.mxu0
  %v1472 = vpop.f32.mrf.mxu0
  %v1473 = vadd.f32 %v1319, %v1472
  %v1474 = vpop.f32.mrf.mxu0
  %1475 = vmatprep.mubr.bf16.mxu0 0
  %1476 = vmatmul.mubr.bf16.gmra.mxu0 %v1406
  %v1477 = vpop.f32.mrf.mxu0
  %v1478 = vadd.f32 %v1324, %v1477
  %v1479 = vpop.f32.mrf.mxu0
  %v1480 = vpop.f32.mrf.mxu0
  %v1481 = vadd.f32 %v1329, %v1480
  %v1482 = vpop.f32.mrf.mxu0
  %1483 = vmatprep.mubr.bf16.mxu0 0
  %1484 = vmatmul.mubr.bf16.gmra.mxu0 %v1407
  %v1485 = vpop.f32.mrf.mxu0
  %v1486 = vadd.f32 %v1334, %v1485
  %v1487 = vpop.f32.mrf.mxu0
  %v1488 = vpop.f32.mrf.mxu0
  %v1489 = vadd.f32 %v1339, %v1488
  %v1490 = vpop.f32.mrf.mxu0
  %1491 = vmatprep.mubr.bf16.mxu0 0
  %1492 = vmatmul.mubr.bf16.gmra.mxu0 %v1408
  %v1493 = vpop.f32.mrf.mxu0
  %v1494 = vadd.f32 %v1344, %v1493
  %v1495 = vpop.f32.mrf.mxu0
  %v1496 = vpop.f32.mrf.mxu0
  %v1497 = vadd.f32 %v1349, %v1496
  %v1498 = vpop.f32.mrf.mxu0
  %1499 = vmatprep.mubr.bf16.mxu0 0
  %1500 = vmatmul.mubr.bf16.gmra.mxu0 %v1409
  %v1501 = vpop.f32.mrf.mxu0
  %v1502 = vadd.f32 %v1354, %v1501
  %v1503 = vpop.f32.mrf.mxu0
  %v1504 = vpop.f32.mrf.mxu0
  %v1505 = vadd.f32 %v1359, %v1504
  %v1506 = vpop.f32.mrf.mxu0
  %1507 = vmatprep.mubr.bf16.mxu0 0
  %1508 = vmatmul.mubr.bf16.gmra.mxu0 %v1410
  %v1509 = vpop.f32.mrf.mxu0
  %v1510 = vadd.f32 %v1364, %v1509
  %v1511 = vpop.f32.mrf.mxu0
  %v1512 = vpop.f32.mrf.mxu0
  %v1513 = vadd.f32 %v1369, %v1512
  %v1514 = vpop.f32.mrf.mxu0
  %1515 = vdwg.mxu0
  %v1516 = vmax.f32 %v1454, 0.0
  %v1517 = vmax.f32 %v1457, 0.0
  %v1518 = vmax.f32 %v1462, 0.0
  %v1519 = vmax.f32 %v1465, 0.0
  %v1520 = vmax.f32 %v1470, 0.0
  %v1521 = vmax.f32 %v1473, 0.0
  %v1522 = vmax.f32 %v1478, 0.0
  %v1523 = vmax.f32 %v1481, 0.0
  %v1524 = vmax.f32 %v1486, 0.0
  %v1525 = vmax.f32 %v1489, 0.0
  %v1526 = vmax.f32 %v1494, 0.0
  %v1527 = vmax.f32 %v1497, 0.0
  %v1528 = vmax.f32 %v1502, 0.0
  %v1529 = vmax.f32 %v1505, 0.0
  %v1530 = vmax.f32 %v1510, 0.0
  %v1531 = vmax.f32 %v1513, 0.0
  %v1532 = vpack.c.bf16 %v1517, %v1516
  %v1533 = vpack.c.bf16 %v1519, %v1518
  %v1534 = vpack.c.bf16 %v1521, %v1520
  %v1535 = vpack.c.bf16 %v1523, %v1522
  %v1536 = vpack.c.bf16 %v1525, %v1524
  %v1537 = vpack.c.bf16 %v1527, %v1526
  %v1538 = vpack.c.bf16 %v1529, %v1528
  %v1539 = vpack.c.bf16 %v1531, %v1530
  %v1540 = vld [vmem:[%s9] sm:$0x1]
  %v1541 = vld [vmem:[%s10] sm:$0x3]
  %1543 = vset.pattern.permute.xlu0 0
  %1544 = vperm.xlu0 %1543, %v1541
  %v1545 = vpop.permute.xlu0 %1544
  %1547 = vmatprep.subr.bf16.mxu0 0
  %1548 = vmatpush1.bf16.msra.mxu0 %v1539
  %1549 = vmatprep.subr.bf16.mxu0 0
  %1550 = vmatpush1.bf16.msra.mxu0 %v1538
  %1551 = vmatprep.subr.bf16.mxu0 0
  %1552 = vmatpush1.bf16.msra.mxu0 %v1537
  %1553 = vmatprep.subr.bf16.mxu0 0
  %1554 = vmatpush1.bf16.msra.mxu0 %v1536
  %1555 = vmatprep.subr.bf16.mxu0 0
  %1556 = vmatpush1.bf16.msra.mxu0 %v1535
  %1557 = vmatprep.subr.bf16.mxu0 0
  %1558 = vmatpush1.bf16.msra.mxu0 %v1534
  %1559 = vmatprep.subr.bf16.mxu0 0
  %1560 = vmatpush1.bf16.msra.mxu0 %v1533
  %1561 = vmatprep.subr.bf16.mxu0 0
  %1562 = vmatpush1.bf16.msra.mxu0 %v1532
  %1563 = vmatprep.subr.bf16.mxu0 0
  %1564 = vmatpush2.bf16.msra.mxu0 0
  %1565 = vmatprep.subr.bf16.mxu0 0
  %1566 = vmatpush2.bf16.msra.mxu0 0
  %1567 = vmatprep.subr.bf16.mxu0 0
  %1568 = vmatpush2.bf16.msra.mxu0 0
  %1569 = vmatprep.subr.bf16.mxu0 0
  %1570 = vmatpush2.bf16.msra.mxu0 0
  %1571 = vmatprep.subr.bf16.mxu0 0
  %1572 = vmatpush2.bf16.msra.mxu0 0
  %1573 = vmatprep.subr.bf16.mxu0 0
  %1574 = vmatpush2.bf16.msra.mxu0 0
  %1575 = vmatprep.subr.bf16.mxu0 0
  %1576 = vmatpush2.bf16.msra.mxu0 0
  %1577 = vmatprep.subr.bf16.mxu0 0
  %1578 = vmatpush2.bf16.msra.mxu0 0
  %1579 = vmatprep.mubr.bf16.mxu0 0
  %1580 = vmatmul.mubr.bf16.gmra.mxu0 %v1540
  %v1581 = vpop.f32.mrf.mxu0
  %v1582 = vadd.f32 %v1545, %v1581
  %v1583 = vpop.f32.mrf.mxu0
  %v1584 = vpop.f32.mrf.mxu0
  %v1585 = vpop.f32.mrf.mxu0
  %1586 = vdwg.mxu0
  %1587 = vst [vmem:[%s11] sm:$0x3] %v1582
  // Predicated region
  $region46: #{forward_packed.1} parent=0 // pred_check
    _
  $region47: #{forward_packed.1} parent=0 // pred_check_branch
    %1589 = sbr.rel (0) target = $region49
  $region48: #{forward_packed.1} parent=0 // pred_region
    _
  $region49: #{forward_packed.1} parent=0 // pred_fallthru
    _
  // Predicated region
  $region50: #{forward_packed.1} parent=0 // pred_check
    _
  $region51: #{forward_packed.1} parent=0 // pred_check_branch
    %1591 = sbr.rel (0) target = $region53
  $region52: #{forward_packed.1} parent=0 // pred_region
    _
  $region53: #{forward_packed.1} parent=0 // pred_fallthru
    _

</llo_original>
